<compile_context>
chip_gen: v7x
topology: tpu7x:2x2x1
jax: 0.10.0
libtpu: 0.0.40
codegen_flags: <defaults>
</compile_context>

<pallas_src>
import functools

import jax
import jax.numpy as jnp
from jax.experimental import pallas as pl
from jax.experimental.pallas import tpu as pltpu


def _layernorm(x, gamma, beta, eps=1e-5):
    mu = jnp.mean(x, axis=-1, keepdims=True)
    var = jnp.mean((x - mu) ** 2, axis=-1, keepdims=True)
    return (x - mu) * jax.lax.rsqrt(var + eps) * gamma + beta


# ----------------------------------------------------------------------------
# Pallas kernel: in_conv + policy pooling + query modulation + out_conv
# ----------------------------------------------------------------------------
def mask_predictor_kernel(
    x_ref, qq_ref, pol_ref,
    ln1_g, ln1_b, w1, b1,
    lno_g, lno_b, wo1, bo1, wo2, bo2, wdiff, bdiff,
    out_ref,
):
    M, C = x_ref.shape               # M = block_b * N folded matmul rows
    Bblk, N, _ = pol_ref.shape
    H = C // 2

    # ---- in_conv: LayerNorm -> Linear(C,C) -> GELU (bf16 matmul, f32 acc) ----
    x = x_ref[...]                                                  # (M, C) f32
    xh = _layernorm(x, ln1_g[...], ln1_b[...])
    xh = jnp.dot(xh.astype(jnp.bfloat16), w1[...],
                 preferred_element_type=jnp.float32) + b1[...]
    xh = jax.nn.gelu(xh, approximate=True)                          # (M, C) f32

    # ---- per-batch policy-weighted global pooling over tokens ----
    xh3 = xh.reshape(Bblk, N, C)
    pol = pol_ref[...]                                              # (Bblk, N, 1)
    # NOTE: parity with torch — all-zero pre_mask for a batch yields inf/nan.
    inv_den = pl.reciprocal(jnp.sum(pol, axis=1, keepdims=True), approx=True)
    glob = jnp.sum(xh3[:, :, H:] * pol, axis=1, keepdims=True) * inv_den  # (Bblk,1,H)
    xcat3 = jnp.concatenate(
        [xh3[:, :, :H], jnp.broadcast_to(glob, (Bblk, N, H))], axis=-1)

    # ---- modulation by precomputed query log-softmax (broadcast over N) ----
    xq = (xcat3 * qq_ref[...]).reshape(M, C)                        # (M, C) f32

    # ---- out_conv: LN -> Lin(C,C/2) -> GELU -> Lin(C/2,C/4) -> GELU
    #                -> Lin(C/4,2) -> Softmax (as sigmoid of logit diff) ----
    oh = _layernorm(xq, lno_g[...], lno_b[...])
    oh = jax.nn.gelu(
        jnp.dot(oh.astype(jnp.bfloat16), wo1[...],
                preferred_element_type=jnp.float32) + bo1[...],
        approximate=True)
    oh = jax.nn.gelu(
        jnp.dot(oh.astype(jnp.bfloat16), wo2[...],
                preferred_element_type=jnp.float32) + bo2[...],
        approximate=True)
    # softmax([l0, l1])[0] == sigmoid(l0 - l1); wdiff = wo3[:,0]-wo3[:,1]
    diff = jnp.sum(oh * wdiff[...], axis=-1, keepdims=True) + bdiff[...]
    p0 = jax.nn.sigmoid(diff)                                       # (M, 1)
    out_ref[...] = jnp.concatenate([p0, 1.0 - p0], axis=-1)         # (M, 2)


# Order in which parameter arrays are passed to the kernel.
_KERNEL_PARAM_NAMES = [
    "ln1_g", "ln1_b", "w1", "b1",
    "lno_g", "lno_b", "wo1", "bo1", "wo2", "bo2", "wdiff", "bdiff",
]


def init_predictor_params(key, C):
    """Deterministic synthetic parameters for one MaskPredictor (embed_dim=C).

    Linear weights are stored (in, out) so the kernel matmuls directly (torch
    stores (out, in); this is synthetic init, not a checkpoint load).  Kernel
    matmul weights are stored bf16; query-path weights stay f32 (run in XLA).
    """
    assert C % 256 == 0, "embed_dim must be a multiple of 256 (lane-aligned halves)"
    ks = jax.random.split(key, 6)
    f32, bf16 = jnp.float32, jnp.bfloat16
    s = 0.02
    wo3 = s * jax.random.normal(ks[3], (C // 4, 2), f32)
    bo3 = jnp.zeros((1, 2), f32)
    return {
        # in_conv
        "ln1_g": jnp.ones((1, C), f32), "ln1_b": jnp.zeros((1, C), f32),
        "w1": (s * jax.random.normal(ks[0], (C, C), f32)).astype(bf16),
        "b1": jnp.zeros((1, C), f32),
        # query_conv (runs outside the kernel, f32)
        "lnq_g": jnp.ones((1, C), f32), "lnq_b": jnp.zeros((1, C), f32),
        "wq1": s * jax.random.normal(ks[1], (C, 2 * C), f32),
        "bq1": jnp.zeros((1, 2 * C), f32),
        "wq2": s * jax.random.normal(ks[2], (2 * C, C), f32),
        "bq2": jnp.zeros((1, C), f32),
        # out_conv
        "lno_g": jnp.ones((1, C), f32), "lno_b": jnp.zeros((1, C), f32),
        "wo1": (s * jax.random.normal(ks[4], (C, C // 2), f32)).astype(bf16),
        "bo1": jnp.zeros((1, C // 2), f32),
        "wo2": (s * jax.random.normal(ks[5], (C // 2, C // 4), f32)).astype(bf16),
        "bo2": jnp.zeros((1, C // 4), f32),
        "wo3": wo3, "bo3": bo3,
        # logit-difference form of the final Linear(C//4, 2) + Softmax
        "wdiff": (wo3[:, 0] - wo3[:, 1]).reshape(1, C // 4),
        "bdiff": bo3[:, 0:1] - bo3[:, 1:2],
    }


def _query_log_softmax(q_bnc, p):
    """query_conv branch, precomputed outside the kernel: (B,N,C) -> (B,C)."""
    qm = jnp.mean(q_bnc.astype(jnp.float32), axis=1)                 # (B, C)
    qh = _layernorm(qm, p["lnq_g"], p["lnq_b"])
    qh = jax.nn.gelu(
        jnp.dot(qh, p["wq1"], preferred_element_type=jnp.float32) + p["bq1"],
        approximate=False)
    qh = jnp.dot(qh, p["wq2"], preferred_element_type=jnp.float32) + p["bq2"]
    return jax.nn.log_softmax(qh, axis=-1)                           # (B, C)


def _choose_block_b(B, N, target_rows=256):
    """Smallest divisor of B whose folded row count fills the 256-row MXU."""
    for d in range(1, B + 1):
        if B % d == 0 and d * N >= target_rows:
            return d
    return B


@functools.partial(jax.jit, static_argnames=("block_b",))
def mask_predictor(x_bnc, q_bnc, policy, params, block_b=None):
    """x_bnc:(B,N,C) f32, q_bnc:(B,N,C), policy:(B,N,1) -> softmax scores (B,N,2)."""
    B, N, C = x_bnc.shape
    assert N % 8 == 0, "token count must be sublane-aligned for in-kernel reshapes"
    assert C % 256 == 0
    if block_b is None:
        block_b = _choose_block_b(B, N)
    assert B % block_b == 0
    grid_b = B // block_b
    m_blk = block_b * N

    # query branch precomputed per batch (one batched matmul pair in XLA)
    qq = _query_log_softmax(q_bnc, params).reshape(B, 1, C)          # (B, 1, C)
    x_flat = x_bnc.astype(jnp.float32).reshape(B * N, C)             # rows = B*N
    policy = policy.astype(jnp.float32)

    weights = [params[k] for k in _KERNEL_PARAM_NAMES]

    in_specs = [
        pl.BlockSpec((m_blk, C), lambda b: (b, 0)),                  # x (folded rows)
        pl.BlockSpec((block_b, 1, C), lambda b: (b, 0, 0)),          # qq
        pl.BlockSpec((block_b, N, 1), lambda b: (b, 0, 0)),          # policy
    ] + [pl.BlockSpec(w.shape, lambda b: (0, 0)) for w in weights]   # params (2D)

    out = pl.pallas_call(
        mask_predictor_kernel,
        out_shape=jax.ShapeDtypeStruct((B * N, 2), jnp.float32),
        grid_spec=pltpu.PrefetchScalarGridSpec(
            num_scalar_prefetch=0,
            grid=(grid_b,),
            in_specs=in_specs,
            out_specs=pl.BlockSpec((m_blk, 2), lambda b: (b, 0)),
        ),
        compiler_params=pltpu.CompilerParams(dimension_semantics=("parallel",)),
    )(x_flat, qq, policy, *weights)
    return out.reshape(B, N, 2)


def mask_predictor_reference(x_bnc, q_bnc, policy, p):
    """Pure-JAX f32/erf reference (torch-parity math) for tolerance checking."""
    B, N, C = x_bnc.shape
    H = C // 2
    g = functools.partial(jax.nn.gelu, approximate=False)
    xh = _layernorm(x_bnc, p["ln1_g"], p["ln1_b"])
    xh = g(jnp.einsum("bnc,ck->bnk", xh, p["w1"].astype(jnp.float32)) + p["b1"])
    glob = (jnp.sum(xh[..., H:] * policy, axis=1, keepdims=True)
            / jnp.sum(policy, axis=1, keepdims=True))
    xcat = jnp.concatenate([xh[..., :H], jnp.broadcast_to(glob, (B, N, H))], axis=-1)
    qq = _query_log_softmax(q_bnc, p)[:, None, :]
    xq = xcat * qq
    oh = _layernorm(xq, p["lno_g"], p["lno_b"])
    oh = g(jnp.einsum("bnc,ck->bnk", oh, p["wo1"].astype(jnp.float32)) + p["bo1"])
    oh = g(jnp.einsum("bnc,ck->bnk", oh, p["wo2"].astype(jnp.float32)) + p["bo2"])
    logits = jnp.einsum("bnc,ck->bnk", oh, p["wo3"]) + p["bo3"]
    return jax.nn.softmax(logits, axis=-1)


class Masking:
    """JAX/Pallas port of the Masking module (eval-mode forward)."""

    def __init__(self, embed_dim=256, pruning_loc=(2, 4), token_ratio=(0.6, 0.3),
                 num_layers=6, key=jax.random.PRNGKey(42)):
        self.embed_dim = embed_dim
        self.pruning_loc = list(pruning_loc)
        self.token_ratio = list(token_ratio)
        self.num_layers = num_layers
        self.loc, self.ratio_train, self.ratio_val = self._pruning_ratio_transform()
        keys = jax.random.split(key, len(self.loc))
        self.params = [init_predictor_params(k, embed_dim) for k in keys]

    def _pruning_ratio_transform(self):
        loc, ratio_train, ratio_val = [], [], []
        for l in range(self.num_layers):
            if l >= self.pruning_loc[0]:
                loc.append(l)
                if l in self.pruning_loc:
                    r = self.token_ratio[self.pruning_loc.index(l)]
                    ratio_train.append(r)
                    ratio_val.append(r)
                else:
                    ratio_train.append(ratio_train[-1])
                    ratio_val.append(1.0)
        return loc, ratio_train, ratio_val

    def __call__(self, x, query, pre_mask, pruning_index, key):
        # x: (N, B, C), query: (h, n, b, c), pre_mask: (B, N, 1)
        if pruning_index not in self.loc:
            raise ValueError("this index is not in pruning")
        N, B, C = x.shape
        idx = self.loc.index(pruning_index)

        query_last = query[-1]                         # (n, b, c)
        x_bnc = jnp.transpose(x, (1, 0, 2))            # (B, N, C)
        q_bnc = jnp.transpose(query_last, (1, 0, 2))   # (B, N, C)

        # NOTE: as in the torch eval path, the predictor output is not consumed
        # downstream (keep_policy is random); we still run it for parity.
        _ = mask_predictor(x_bnc, q_bnc, pre_mask, self.params[idx])

        keep_token_num = int(N * self.ratio_val[idx])
        keep_policy = jax.random.randint(
            key, (1, keep_token_num), 0, N, dtype=jnp.int32)
        # batch_index_select(pre_mask (B,N,1), keep_policy (1,K)) -> (B,K,1)
        post_mask = jnp.take(pre_mask, keep_policy[0], axis=1)
        return post_mask, keep_policy


if __name__ == "__main__":
    key = jax.random.PRNGKey(0)
    k_x, k_q, k_params, k_policy = jax.random.split(key, 4)

    B, N, C, H_heads = 2, 16, 256, 2        # embed_dim=256 is the module default
    x = jax.random.normal(k_x, (N, B, C), jnp.float32)                # (N, B, C)
    query = jax.random.normal(k_q, (H_heads, N, B, C), jnp.float32)   # (h, n, b, c)
    pre_mask = jnp.ones((B, N, 1), jnp.float32)

    model = Masking(embed_dim=C, pruning_loc=[2, 4], token_ratio=[0.6, 0.3],
                    num_layers=6, key=k_params)

    post_mask, keep_policy = model(x, query, pre_mask, pruning_index=2, key=k_policy)
    jax.block_until_ready(post_mask)
    jax.block_until_ready(keep_policy)

    # Validate the optimized (bf16 / tanh-GELU / sigmoid-tail) kernel against
    # the pure-JAX f32/erf reference.
    x_bnc = jnp.transpose(x, (1, 0, 2))
    q_bnc = jnp.transpose(query[-1], (1, 0, 2))
    got = mask_predictor(x_bnc, q_bnc, pre_mask, model.params[0])
    ref = mask_predictor_reference(x_bnc, q_bnc, pre_mask, model.params[0])
    jax.block_until_ready(got)
    err = float(jnp.max(jnp.abs(got - ref)))
    assert err < 3e-2, f"kernel deviates from reference: max abs err {err}"

    assert post_mask.shape == (B, int(N * 0.6), 1)
    assert keep_policy.shape == (1, int(N * 0.6))
    print("KERNEL_OK")
</pallas_src>

<mosaic_0001>
module attributes {stable_mosaic.version = 11 : i64} {
  func.func @mask_predictor_kernel(%arg0: i32, %arg1: memref<32x256xf32, #tpu.memory_space<vmem>>, %arg2: memref<2x1x256xf32, #tpu.memory_space<vmem>>, %arg3: memref<2x16x1xf32, #tpu.memory_space<vmem>>, %arg4: memref<1x256xf32, #tpu.memory_space<vmem>>, %arg5: memref<1x256xf32, #tpu.memory_space<vmem>>, %arg6: memref<256x256xbf16, #tpu.memory_space<vmem>>, %arg7: memref<1x256xf32, #tpu.memory_space<vmem>>, %arg8: memref<1x256xf32, #tpu.memory_space<vmem>>, %arg9: memref<1x256xf32, #tpu.memory_space<vmem>>, %arg10: memref<256x128xbf16, #tpu.memory_space<vmem>>, %arg11: memref<1x128xf32, #tpu.memory_space<vmem>>, %arg12: memref<128x64xbf16, #tpu.memory_space<vmem>>, %arg13: memref<1x64xf32, #tpu.memory_space<vmem>>, %arg14: memref<1x64xf32, #tpu.memory_space<vmem>>, %arg15: memref<1x1xf32, #tpu.memory_space<vmem>>, %arg16: memref<32x2xf32, #tpu.memory_space<vmem>>) attributes {dimension_semantics = [#tpu.dimension_semantics<parallel>], iteration_bounds = array<i64: 1>, scalar_prefetch = 0 : i64, scratch_operands = 0 : i64, tpu.core_type = #tpu.core_type<tc>, window_params = [{transform_indices = @transform_0, window_bounds = array<i64: 32, 256>}, {transform_indices = @transform_1, window_bounds = array<i64: 2, 1, 256>}, {transform_indices = @transform_2, window_bounds = array<i64: 2, 16, 1>}, {pipeline_mode = #tpu.pipeline_mode<synchronous>, transform_indices = @transform_3, window_bounds = array<i64: 1, 256>}, {pipeline_mode = #tpu.pipeline_mode<synchronous>, transform_indices = @transform_4, window_bounds = array<i64: 1, 256>}, {pipeline_mode = #tpu.pipeline_mode<synchronous>, transform_indices = @transform_5, window_bounds = array<i64: 256, 256>}, {pipeline_mode = #tpu.pipeline_mode<synchronous>, transform_indices = @transform_6, window_bounds = array<i64: 1, 256>}, {pipeline_mode = #tpu.pipeline_mode<synchronous>, transform_indices = @transform_7, window_bounds = array<i64: 1, 256>}, {pipeline_mode = #tpu.pipeline_mode<synchronous>, transform_indices = @transform_8, window_bounds = array<i64: 1, 256>}, {pipeline_mode = #tpu.pipeline_mode<synchronous>, transform_indices = @transform_9, window_bounds = array<i64: 256, 128>}, {pipeline_mode = #tpu.pipeline_mode<synchronous>, transform_indices = @transform_10, window_bounds = array<i64: 1, 128>}, {pipeline_mode = #tpu.pipeline_mode<synchronous>, transform_indices = @transform_11, window_bounds = array<i64: 128, 64>}, {pipeline_mode = #tpu.pipeline_mode<synchronous>, transform_indices = @transform_12, window_bounds = array<i64: 1, 64>}, {pipeline_mode = #tpu.pipeline_mode<synchronous>, transform_indices = @transform_13, window_bounds = array<i64: 1, 64>}, {pipeline_mode = #tpu.pipeline_mode<synchronous>, transform_indices = @transform_14, window_bounds = array<i64: 1, 1>}, {transform_indices = @transform_15, window_bounds = array<i64: 32, 2>}]} {
    %c0 = arith.constant 0 : index
    %c0_0 = arith.constant 0 : index
    %0 = vector.load %arg1[%c0, %c0_0] : memref<32x256xf32, #tpu.memory_space<vmem>>, vector<32x256xf32>
    %c0_1 = arith.constant 0 : index
    %c0_2 = arith.constant 0 : index
    %1 = vector.load %arg4[%c0_1, %c0_2] : memref<1x256xf32, #tpu.memory_space<vmem>>, vector<1x256xf32>
    %c0_3 = arith.constant 0 : index
    %c0_4 = arith.constant 0 : index
    %2 = vector.load %arg5[%c0_3, %c0_4] : memref<1x256xf32, #tpu.memory_space<vmem>>, vector<1x256xf32>
    %cst = arith.constant dense<0.000000e+00> : vector<32xf32>
    %3 = vector.multi_reduction <add>, %0, %cst [1] : vector<32x256xf32> to vector<32xf32>
    %4 = vector.shape_cast %3 : vector<32xf32> to vector<32x1xf32>
    %cst_5 = arith.constant 2.560000e+02 : f32
    %5 = vector.broadcast %cst_5 : f32 to vector<32x1xf32>
    %6 = arith.divf %4, %5 : vector<32x1xf32>
    %7 = vector.broadcast %6 : vector<32x1xf32> to vector<32x256xf32>
    %8 = arith.subf %0, %7 : vector<32x256xf32>
    %9 = arith.mulf %8, %8 : vector<32x256xf32>
    %cst_6 = arith.constant dense<0.000000e+00> : vector<32xf32>
    %10 = vector.multi_reduction <add>, %9, %cst_6 [1] : vector<32x256xf32> to vector<32xf32>
    %11 = vector.shape_cast %10 : vector<32xf32> to vector<32x1xf32>
    %cst_7 = arith.constant 2.560000e+02 : f32
    %12 = vector.broadcast %cst_7 : f32 to vector<32x1xf32>
    %13 = arith.divf %11, %12 : vector<32x1xf32>
    %14 = vector.broadcast %6 : vector<32x1xf32> to vector<32x256xf32>
    %15 = arith.subf %0, %14 : vector<32x256xf32>
    %cst_8 = arith.constant 9.99999974E-6 : f32
    %16 = vector.broadcast %cst_8 : f32 to vector<32x1xf32>
    %17 = arith.addf %13, %16 : vector<32x1xf32>
    %18 = math.rsqrt %17 : vector<32x1xf32>
    %19 = vector.broadcast %18 : vector<32x1xf32> to vector<32x256xf32>
    %20 = arith.mulf %15, %19 : vector<32x256xf32>
    %21 = vector.broadcast %1 : vector<1x256xf32> to vector<32x256xf32>
    %22 = arith.mulf %20, %21 : vector<32x256xf32>
    %23 = vector.broadcast %2 : vector<1x256xf32> to vector<32x256xf32>
    %24 = arith.addf %22, %23 : vector<32x256xf32>
    %25 = arith.truncf %24 : vector<32x256xf32> to vector<32x256xbf16>
    %c0_9 = arith.constant 0 : index
    %c0_10 = arith.constant 0 : index
    %26 = vector.load %arg6[%c0_9, %c0_10] : memref<256x256xbf16, #tpu.memory_space<vmem>>, vector<256x256xbf16>
    %cst_11 = arith.constant dense<0.000000e+00> : vector<32x256xf32>
    %27 = tpu.matmul %25, %26, %cst_11 {dimension_numbers = #tpu.dot_dimension_numbers<[1], [0], [0], [1], [0, 0, 1, 1], [], []>} : vector<32x256xbf16>, vector<256x256xbf16>, vector<32x256xf32> -> vector<32x256xf32>
    %c0_12 = arith.constant 0 : index
    %c0_13 = arith.constant 0 : index
    %28 = vector.load %arg7[%c0_12, %c0_13] : memref<1x256xf32, #tpu.memory_space<vmem>>, vector<1x256xf32>
    %29 = vector.broadcast %28 : vector<1x256xf32> to vector<32x256xf32>
    %30 = arith.addf %27, %29 : vector<32x256xf32>
    %31 = arith.mulf %30, %30 : vector<32x256xf32>
    %32 = arith.mulf %30, %31 : vector<32x256xf32>
    %cst_14 = arith.constant 4.471500e-02 : f32
    %33 = vector.broadcast %cst_14 : f32 to vector<32x256xf32>
    %34 = arith.mulf %33, %32 : vector<32x256xf32>
    %35 = arith.addf %30, %34 : vector<32x256xf32>
    %cst_15 = arith.constant 0.797884583 : f32
    %36 = vector.broadcast %cst_15 : f32 to vector<32x256xf32>
    %37 = arith.mulf %36, %35 : vector<32x256xf32>
    %38 = math.tanh %37 : vector<32x256xf32>
    %cst_16 = arith.constant 1.000000e+00 : f32
    %39 = vector.broadcast %cst_16 : f32 to vector<32x256xf32>
    %40 = arith.addf %39, %38 : vector<32x256xf32>
    %cst_17 = arith.constant 5.000000e-01 : f32
    %41 = vector.broadcast %cst_17 : f32 to vector<32x256xf32>
    %42 = arith.mulf %41, %40 : vector<32x256xf32>
    %43 = arith.mulf %30, %42 : vector<32x256xf32>
    %44 = vector.shape_cast %43 : vector<32x256xf32> to vector<2x16x256xf32>
    %c0_18 = arith.constant 0 : index
    %c0_19 = arith.constant 0 : index
    %c0_20 = arith.constant 0 : index
    %45 = vector.load %arg3[%c0_18, %c0_19, %c0_20] : memref<2x16x1xf32, #tpu.memory_space<vmem>>, vector<2x16x1xf32>
    %cst_21 = arith.constant dense<0.000000e+00> : vector<2x1xf32>
    %46 = vector.multi_reduction <add>, %45, %cst_21 [1] : vector<2x16x1xf32> to vector<2x1xf32>
    %47 = vector.shape_cast %46 : vector<2x1xf32> to vector<2x1x1xf32>
    %48 = tpu.reciprocal %47 {approx = true} : vector<2x1x1xf32> -> vector<2x1x1xf32>
    %49 = vector.extract_strided_slice %44 {offsets = [0, 0, 128], sizes = [2, 16, 128], strides = [1, 1, 1]} : vector<2x16x256xf32> to vector<2x16x128xf32>
    %50 = vector.broadcast %45 : vector<2x16x1xf32> to vector<2x16x128xf32>
    %51 = arith.mulf %49, %50 : vector<2x16x128xf32>
    %cst_22 = arith.constant dense<0.000000e+00> : vector<2x128xf32>
    %52 = vector.multi_reduction <add>, %51, %cst_22 [1] : vector<2x16x128xf32> to vector<2x128xf32>
    %53 = vector.shape_cast %52 : vector<2x128xf32> to vector<2x1x128xf32>
    %54 = vector.broadcast %48 : vector<2x1x1xf32> to vector<2x1x128xf32>
    %55 = arith.mulf %53, %54 : vector<2x1x128xf32>
    %56 = vector.extract_strided_slice %44 {offsets = [0, 0, 0], sizes = [2, 16, 128], strides = [1, 1, 1]} : vector<2x16x256xf32> to vector<2x16x128xf32>
    %57 = vector.shape_cast %55 : vector<2x1x128xf32> to vector<2x1x128xf32>
    %58 = vector.broadcast %57 : vector<2x1x128xf32> to vector<2x16x128xf32>
    %59 = tpu.concatenate %56, %58 in 2 : vector<2x16x128xf32>, vector<2x16x128xf32> -> vector<2x16x256xf32>
    %c0_23 = arith.constant 0 : index
    %c0_24 = arith.constant 0 : index
    %c0_25 = arith.constant 0 : index
    %60 = vector.load %arg2[%c0_23, %c0_24, %c0_25] : memref<2x1x256xf32, #tpu.memory_space<vmem>>, vector<2x1x256xf32>
    %61 = vector.broadcast %60 : vector<2x1x256xf32> to vector<2x16x256xf32>
    %62 = arith.mulf %59, %61 : vector<2x16x256xf32>
    %63 = vector.shape_cast %62 : vector<2x16x256xf32> to vector<32x256xf32>
    %c0_26 = arith.constant 0 : index
    %c0_27 = arith.constant 0 : index
    %64 = vector.load %arg8[%c0_26, %c0_27] : memref<1x256xf32, #tpu.memory_space<vmem>>, vector<1x256xf32>
    %c0_28 = arith.constant 0 : index
    %c0_29 = arith.constant 0 : index
    %65 = vector.load %arg9[%c0_28, %c0_29] : memref<1x256xf32, #tpu.memory_space<vmem>>, vector<1x256xf32>
    %cst_30 = arith.constant dense<0.000000e+00> : vector<32xf32>
    %66 = vector.multi_reduction <add>, %63, %cst_30 [1] : vector<32x256xf32> to vector<32xf32>
    %67 = vector.shape_cast %66 : vector<32xf32> to vector<32x1xf32>
    %cst_31 = arith.constant 2.560000e+02 : f32
    %68 = vector.broadcast %cst_31 : f32 to vector<32x1xf32>
    %69 = arith.divf %67, %68 : vector<32x1xf32>
    %70 = vector.broadcast %69 : vector<32x1xf32> to vector<32x256xf32>
    %71 = arith.subf %63, %70 : vector<32x256xf32>
    %72 = arith.mulf %71, %71 : vector<32x256xf32>
    %cst_32 = arith.constant dense<0.000000e+00> : vector<32xf32>
    %73 = vector.multi_reduction <add>, %72, %cst_32 [1] : vector<32x256xf32> to vector<32xf32>
    %74 = vector.shape_cast %73 : vector<32xf32> to vector<32x1xf32>
    %cst_33 = arith.constant 2.560000e+02 : f32
    %75 = vector.broadcast %cst_33 : f32 to vector<32x1xf32>
    %76 = arith.divf %74, %75 : vector<32x1xf32>
    %77 = vector.broadcast %69 : vector<32x1xf32> to vector<32x256xf32>
    %78 = arith.subf %63, %77 : vector<32x256xf32>
    %cst_34 = arith.constant 9.99999974E-6 : f32
    %79 = vector.broadcast %cst_34 : f32 to vector<32x1xf32>
    %80 = arith.addf %76, %79 : vector<32x1xf32>
    %81 = math.rsqrt %80 : vector<32x1xf32>
    %82 = vector.broadcast %81 : vector<32x1xf32> to vector<32x256xf32>
    %83 = arith.mulf %78, %82 : vector<32x256xf32>
    %84 = vector.broadcast %64 : vector<1x256xf32> to vector<32x256xf32>
    %85 = arith.mulf %83, %84 : vector<32x256xf32>
    %86 = vector.broadcast %65 : vector<1x256xf32> to vector<32x256xf32>
    %87 = arith.addf %85, %86 : vector<32x256xf32>
    %88 = arith.truncf %87 : vector<32x256xf32> to vector<32x256xbf16>
    %c0_35 = arith.constant 0 : index
    %c0_36 = arith.constant 0 : index
    %89 = vector.load %arg10[%c0_35, %c0_36] : memref<256x128xbf16, #tpu.memory_space<vmem>>, vector<256x128xbf16>
    %cst_37 = arith.constant dense<0.000000e+00> : vector<32x128xf32>
    %90 = tpu.matmul %88, %89, %cst_37 {dimension_numbers = #tpu.dot_dimension_numbers<[1], [0], [0], [1], [0, 0, 1, 1], [], []>} : vector<32x256xbf16>, vector<256x128xbf16>, vector<32x128xf32> -> vector<32x128xf32>
    %c0_38 = arith.constant 0 : index
    %c0_39 = arith.constant 0 : index
    %91 = vector.load %arg11[%c0_38, %c0_39] : memref<1x128xf32, #tpu.memory_space<vmem>>, vector<1x128xf32>
    %92 = vector.broadcast %91 : vector<1x128xf32> to vector<32x128xf32>
    %93 = arith.addf %90, %92 : vector<32x128xf32>
    %94 = arith.mulf %93, %93 : vector<32x128xf32>
    %95 = arith.mulf %93, %94 : vector<32x128xf32>
    %cst_40 = arith.constant 4.471500e-02 : f32
    %96 = vector.broadcast %cst_40 : f32 to vector<32x128xf32>
    %97 = arith.mulf %96, %95 : vector<32x128xf32>
    %98 = arith.addf %93, %97 : vector<32x128xf32>
    %cst_41 = arith.constant 0.797884583 : f32
    %99 = vector.broadcast %cst_41 : f32 to vector<32x128xf32>
    %100 = arith.mulf %99, %98 : vector<32x128xf32>
    %101 = math.tanh %100 : vector<32x128xf32>
    %cst_42 = arith.constant 1.000000e+00 : f32
    %102 = vector.broadcast %cst_42 : f32 to vector<32x128xf32>
    %103 = arith.addf %102, %101 : vector<32x128xf32>
    %cst_43 = arith.constant 5.000000e-01 : f32
    %104 = vector.broadcast %cst_43 : f32 to vector<32x128xf32>
    %105 = arith.mulf %104, %103 : vector<32x128xf32>
    %106 = arith.mulf %93, %105 : vector<32x128xf32>
    %107 = arith.truncf %106 : vector<32x128xf32> to vector<32x128xbf16>
    %c0_44 = arith.constant 0 : index
    %c0_45 = arith.constant 0 : index
    %108 = vector.load %arg12[%c0_44, %c0_45] : memref<128x64xbf16, #tpu.memory_space<vmem>>, vector<128x64xbf16>
    %cst_46 = arith.constant dense<0.000000e+00> : vector<32x64xf32>
    %109 = tpu.matmul %107, %108, %cst_46 {dimension_numbers = #tpu.dot_dimension_numbers<[1], [0], [0], [1], [0, 0, 1, 1], [], []>} : vector<32x128xbf16>, vector<128x64xbf16>, vector<32x64xf32> -> vector<32x64xf32>
    %c0_47 = arith.constant 0 : index
    %c0_48 = arith.constant 0 : index
    %110 = vector.load %arg13[%c0_47, %c0_48] : memref<1x64xf32, #tpu.memory_space<vmem>>, vector<1x64xf32>
    %111 = vector.broadcast %110 : vector<1x64xf32> to vector<32x64xf32>
    %112 = arith.addf %109, %111 : vector<32x64xf32>
    %113 = arith.mulf %112, %112 : vector<32x64xf32>
    %114 = arith.mulf %112, %113 : vector<32x64xf32>
    %cst_49 = arith.constant 4.471500e-02 : f32
    %115 = vector.broadcast %cst_49 : f32 to vector<32x64xf32>
    %116 = arith.mulf %115, %114 : vector<32x64xf32>
    %117 = arith.addf %112, %116 : vector<32x64xf32>
    %cst_50 = arith.constant 0.797884583 : f32
    %118 = vector.broadcast %cst_50 : f32 to vector<32x64xf32>
    %119 = arith.mulf %118, %117 : vector<32x64xf32>
    %120 = math.tanh %119 : vector<32x64xf32>
    %cst_51 = arith.constant 1.000000e+00 : f32
    %121 = vector.broadcast %cst_51 : f32 to vector<32x64xf32>
    %122 = arith.addf %121, %120 : vector<32x64xf32>
    %cst_52 = arith.constant 5.000000e-01 : f32
    %123 = vector.broadcast %cst_52 : f32 to vector<32x64xf32>
    %124 = arith.mulf %123, %122 : vector<32x64xf32>
    %125 = arith.mulf %112, %124 : vector<32x64xf32>
    %c0_53 = arith.constant 0 : index
    %c0_54 = arith.constant 0 : index
    %126 = vector.load %arg14[%c0_53, %c0_54] : memref<1x64xf32, #tpu.memory_space<vmem>>, vector<1x64xf32>
    %127 = vector.broadcast %126 : vector<1x64xf32> to vector<32x64xf32>
    %128 = arith.mulf %125, %127 : vector<32x64xf32>
    %cst_55 = arith.constant dense<0.000000e+00> : vector<32xf32>
    %129 = vector.multi_reduction <add>, %128, %cst_55 [1] : vector<32x64xf32> to vector<32xf32>
    %130 = vector.shape_cast %129 : vector<32xf32> to vector<32x1xf32>
    %c0_56 = arith.constant 0 : index
    %c0_57 = arith.constant 0 : index
    %131 = vector.load %arg15[%c0_56, %c0_57] : memref<1x1xf32, #tpu.memory_space<vmem>>, vector<1x1xf32>
    %132 = vector.broadcast %131 : vector<1x1xf32> to vector<32x1xf32>
    %133 = arith.addf %130, %132 : vector<32x1xf32>
    %134 = arith.negf %133 : vector<32x1xf32>
    %135 = math.exp %134 : vector<32x1xf32>
    %cst_58 = arith.constant 1.000000e+00 : f32
    %136 = vector.broadcast %cst_58 : f32 to vector<32x1xf32>
    %137 = arith.addf %136, %135 : vector<32x1xf32>
    %138 = arith.divf %136, %137 : vector<32x1xf32>
    %cst_59 = arith.constant 1.000000e+00 : f32
    %139 = vector.broadcast %cst_59 : f32 to vector<32x1xf32>
    %140 = arith.subf %139, %138 : vector<32x1xf32>
    %141 = tpu.concatenate %138, %140 in 1 : vector<32x1xf32>, vector<32x1xf32> -> vector<32x2xf32>
    %c0_60 = arith.constant 0 : index
    %c0_61 = arith.constant 0 : index
    %142 = vector.load %arg16[%c0_60, %c0_61] : memref<32x2xf32, #tpu.memory_space<vmem>>, vector<32x2xf32>
    tpu.vector_store %arg16[%c0_60, %c0_61], %141 {strides = array<i32>} : memref<32x2xf32, #tpu.memory_space<vmem>>, vector<32x2xf32>,
    return
  }
  func.func @transform_0(%arg0: i32) -> (i32, i32) {
    %c0_i32 = arith.constant 0 : i32
    %c0_i32_0 = arith.constant 0 : i32
    return %arg0, %c0_i32 : i32, i32
  }
  func.func @transform_1(%arg0: i32) -> (i32, i32, i32) {
    %c0_i32 = arith.constant 0 : i32
    %c0_i32_0 = arith.constant 0 : i32
    %c0_i32_1 = arith.constant 0 : i32
    return %arg0, %c0_i32, %c0_i32_0 : i32, i32, i32
  }
  func.func @transform_2(%arg0: i32) -> (i32, i32, i32) {
    %c0_i32 = arith.constant 0 : i32
    %c0_i32_0 = arith.constant 0 : i32
    %c0_i32_1 = arith.constant 0 : i32
    return %arg0, %c0_i32, %c0_i32_0 : i32, i32, i32
  }
  func.func @transform_3(%arg0: i32) -> (i32, i32) {
    %c0_i32 = arith.constant 0 : i32
    %c0_i32_0 = arith.constant 0 : i32
    %c0_i32_1 = arith.constant 0 : i32
    return %c0_i32, %c0_i32_0 : i32, i32
  }
  func.func @transform_4(%arg0: i32) -> (i32, i32) {
    %c0_i32 = arith.constant 0 : i32
    %c0_i32_0 = arith.constant 0 : i32
    %c0_i32_1 = arith.constant 0 : i32
    return %c0_i32, %c0_i32_0 : i32, i32
  }
  func.func @transform_5(%arg0: i32) -> (i32, i32) {
    %c0_i32 = arith.constant 0 : i32
    %c0_i32_0 = arith.constant 0 : i32
    %c0_i32_1 = arith.constant 0 : i32
    return %c0_i32, %c0_i32_0 : i32, i32
  }
  func.func @transform_6(%arg0: i32) -> (i32, i32) {
    %c0_i32 = arith.constant 0 : i32
    %c0_i32_0 = arith.constant 0 : i32
    %c0_i32_1 = arith.constant 0 : i32
    return %c0_i32, %c0_i32_0 : i32, i32
  }
  func.func @transform_7(%arg0: i32) -> (i32, i32) {
    %c0_i32 = arith.constant 0 : i32
    %c0_i32_0 = arith.constant 0 : i32
    %c0_i32_1 = arith.constant 0 : i32
    return %c0_i32, %c0_i32_0 : i32, i32
  }
  func.func @transform_8(%arg0: i32) -> (i32, i32) {
    %c0_i32 = arith.constant 0 : i32
    %c0_i32_0 = arith.constant 0 : i32
    %c0_i32_1 = arith.constant 0 : i32
    return %c0_i32, %c0_i32_0 : i32, i32
  }
  func.func @transform_9(%arg0: i32) -> (i32, i32) {
    %c0_i32 = arith.constant 0 : i32
    %c0_i32_0 = arith.constant 0 : i32
    %c0_i32_1 = arith.constant 0 : i32
    return %c0_i32, %c0_i32_0 : i32, i32
  }
  func.func @transform_10(%arg0: i32) -> (i32, i32) {
    %c0_i32 = arith.constant 0 : i32
    %c0_i32_0 = arith.constant 0 : i32
    %c0_i32_1 = arith.constant 0 : i32
    return %c0_i32, %c0_i32_0 : i32, i32
  }
  func.func @transform_11(%arg0: i32) -> (i32, i32) {
    %c0_i32 = arith.constant 0 : i32
    %c0_i32_0 = arith.constant 0 : i32
    %c0_i32_1 = arith.constant 0 : i32
    return %c0_i32, %c0_i32_0 : i32, i32
  }
  func.func @transform_12(%arg0: i32) -> (i32, i32) {
    %c0_i32 = arith.constant 0 : i32
    %c0_i32_0 = arith.constant 0 : i32
    %c0_i32_1 = arith.constant 0 : i32
    return %c0_i32, %c0_i32_0 : i32, i32
  }
  func.func @transform_13(%arg0: i32) -> (i32, i32) {
    %c0_i32 = arith.constant 0 : i32
    %c0_i32_0 = arith.constant 0 : i32
    %c0_i32_1 = arith.constant 0 : i32
    return %c0_i32, %c0_i32_0 : i32, i32
  }
  func.func @transform_14(%arg0: i32) -> (i32, i32) {
    %c0_i32 = arith.constant 0 : i32
    %c0_i32_0 = arith.constant 0 : i32
    %c0_i32_1 = arith.constant 0 : i32
    return %c0_i32, %c0_i32_0 : i32, i32
  }
  func.func @transform_15(%arg0: i32) -> (i32, i32) {
    %c0_i32 = arith.constant 0 : i32
    %c0_i32_0 = arith.constant 0 : i32
    return %arg0, %c0_i32 : i32, i32
  }
}

</mosaic_0001>

<llo_original>
// kernel: mask_predictor.1
$region0: #{mask_predictor.1}
  #allocation0 [shape = 'u32[]', space=smem, size = 0x4, offset = 0x4, fixed_abs, tag = 'smem constant byte address 0x4 - core index']
  #allocation1 [shape = 'u32[144,128]{1,0:T(1,128)}', space=vmem, size = 0x12000, scoped, tag = 'internal scratch']
  #allocation2 [shape = 'f32[1,1]{1,0:T(1,128)S(1)}', space=vmem, size = 0x200, scoped, tag = 'scoped memory for mask_predictor.1']
  %s0 = inlined_call_operand.vmem [shape: f32[32,256], index: 0, kind: input, shape index: {}]
  %s1 = inlined_call_operand.vmem [shape: f32[2,1,256], index: 1, kind: input, shape index: {}]
  %s2 = inlined_call_operand.vmem [shape: f32[2,16,1], index: 2, kind: input, shape index: {}]
  %s3 = inlined_call_operand.vmem [shape: f32[1,256], index: 3, kind: input, shape index: {}]
  %s4 = inlined_call_operand.vmem [shape: f32[1,256], index: 4, kind: input, shape index: {}]
  %s5 = inlined_call_operand.vmem [shape: bf16[256,256], index: 5, kind: input, shape index: {}]
  %s6 = inlined_call_operand.vmem [shape: f32[1,256], index: 6, kind: input, shape index: {}]
  %s7 = inlined_call_operand.vmem [shape: f32[1,256], index: 7, kind: input, shape index: {}]
  %s8 = inlined_call_operand.vmem [shape: f32[1,256], index: 8, kind: input, shape index: {}]
  %s9 = inlined_call_operand.vmem [shape: bf16[256,128], index: 9, kind: input, shape index: {}]
  %s10 = inlined_call_operand.vmem [shape: f32[1,128], index: 10, kind: input, shape index: {}]
  %s11 = inlined_call_operand.vmem [shape: bf16[128,64], index: 11, kind: input, shape index: {}]
  %s12 = inlined_call_operand.vmem [shape: f32[1,64], index: 12, kind: input, shape index: {}]
  %s13 = inlined_call_operand.vmem [shape: f32[1,64], index: 13, kind: input, shape index: {}]
  %s14 = inlined_call_operand.<no memory space> [shape: f32[1,1], index: 14, kind: input, shape index: {}]
  %s15 = inlined_call_operand.vmem [shape: f32[32,2], index: 15, kind: output, shape index: {}]
  %s16 = sld [smem:[#allocation0]]
  $region70: #{mask_predictor.1} parent=0
    _
  %s18 = ssub.s32 1, %s16
  %s19 = scalar_select 0, %s18, %s16
  %v20 = vstv %s14
  %21 = vst [vmem:[#allocation2] sm:$0x1] %v20
  // Predicated region
  $region2: #{mask_predictor.1} parent=0 // pred_check
    _
  $region3: #{mask_predictor.1} parent=0 // pred_check_branch
    %23 = sbr.rel (0) target = $region5
  $region4: #{mask_predictor.1} parent=0 // pred_region
    _
  $region5: #{mask_predictor.1} parent=0 // pred_fallthru
    _
  // Predicated region
  $region6: #{mask_predictor.1} parent=0 // pred_check
    _
  $region7: #{mask_predictor.1} parent=0 // pred_check_branch
    %25 = sbr.rel (0) target = $region9
  $region8: #{mask_predictor.1} parent=0 // pred_region
    _
  $region9: #{mask_predictor.1} parent=0 // pred_fallthru
    _
  // Predicated region
  $region10: #{mask_predictor.1} parent=0 // pred_check
    _
  $region11: #{mask_predictor.1} parent=0 // pred_check_branch
    %27 = sbr.rel (0) target = $region13
  $region12: #{mask_predictor.1} parent=0 // pred_region
    _
  $region13: #{mask_predictor.1} parent=0 // pred_fallthru
    _
  // Predicated region
  $region14: #{mask_predictor.1} parent=0 // pred_check
    _
  $region15: #{mask_predictor.1} parent=0 // pred_check_branch
    %29 = sbr.rel (0) target = $region17
  $region16: #{mask_predictor.1} parent=0 // pred_region
    _
  $region17: #{mask_predictor.1} parent=0 // pred_fallthru
    _
  // Predicated region
  $region18: #{mask_predictor.1} parent=0 // pred_check
    _
  $region19: #{mask_predictor.1} parent=0 // pred_check_branch
    %31 = sbr.rel (0) target = $region21
  $region20: #{mask_predictor.1} parent=0 // pred_region
    _
  $region21: #{mask_predictor.1} parent=0 // pred_fallthru
    _
  // Predicated region
  $region22: #{mask_predictor.1} parent=0 // pred_check
    _
  $region23: #{mask_predictor.1} parent=0 // pred_check_branch
    %33 = sbr.rel (0) target = $region25
  $region24: #{mask_predictor.1} parent=0 // pred_region
    _
  $region25: #{mask_predictor.1} parent=0 // pred_fallthru
    _
  // Predicated region
  $region26: #{mask_predictor.1} parent=0 // pred_check
    _
  $region27: #{mask_predictor.1} parent=0 // pred_check_branch
    %35 = sbr.rel (0) target = $region29
  $region28: #{mask_predictor.1} parent=0 // pred_region
    _
  $region29: #{mask_predictor.1} parent=0 // pred_fallthru
    _
  // Predicated region
  $region30: #{mask_predictor.1} parent=0 // pred_check
    _
  $region31: #{mask_predictor.1} parent=0 // pred_check_branch
    %37 = sbr.rel (0) target = $region33
  $region32: #{mask_predictor.1} parent=0 // pred_region
    _
  $region33: #{mask_predictor.1} parent=0 // pred_fallthru
    _
  // Predicated region
  $region34: #{mask_predictor.1} parent=0 // pred_check
    _
  $region35: #{mask_predictor.1} parent=0 // pred_check_branch
    %39 = sbr.rel (0) target = $region37
  $region36: #{mask_predictor.1} parent=0 // pred_region
    _
  $region37: #{mask_predictor.1} parent=0 // pred_fallthru
    _
  // Predicated region
  $region38: #{mask_predictor.1} parent=0 // pred_check
    _
  $region39: #{mask_predictor.1} parent=0 // pred_check_branch
    %41 = sbr.rel (0) target = $region41
  $region40: #{mask_predictor.1} parent=0 // pred_region
    _
  $region41: #{mask_predictor.1} parent=0 // pred_fallthru
    _
  // Predicated region
  $region42: #{mask_predictor.1} parent=0 // pred_check
    _
  $region43: #{mask_predictor.1} parent=0 // pred_check_branch
    %43 = sbr.rel (0) target = $region45
  $region44: #{mask_predictor.1} parent=0 // pred_region
    _
  $region45: #{mask_predictor.1} parent=0 // pred_fallthru
    _
  // Predicated region
  $region46: #{mask_predictor.1} parent=0 // pred_check
    _
  $region47: #{mask_predictor.1} parent=0 // pred_check_branch
    %45 = sbr.rel (0) target = $region49
  $region48: #{mask_predictor.1} parent=0 // pred_region
    _
  $region49: #{mask_predictor.1} parent=0 // pred_fallthru
    _
  // Predicated region
  $region50: #{mask_predictor.1} parent=0 // pred_check
    _
  $region51: #{mask_predictor.1} parent=0 // pred_check_branch
    %47 = sbr.rel (0) target = $region53
  $region52: #{mask_predictor.1} parent=0 // pred_region
    _
  $region53: #{mask_predictor.1} parent=0 // pred_fallthru
    _
  // Predicated region
  $region54: #{mask_predictor.1} parent=0 // pred_check
    _
  $region55: #{mask_predictor.1} parent=0 // pred_check_branch
    %49 = sbr.rel (0) target = $region57
  $region56: #{mask_predictor.1} parent=0 // pred_region
    _
  $region57: #{mask_predictor.1} parent=0 // pred_fallthru
    _
  // Predicated region
  $region58: #{mask_predictor.1} parent=0 // pred_check
    _
  $region59: #{mask_predictor.1} parent=0 // pred_check_branch
    %51 = sbr.rel (0) target = $region61
  $region60: #{mask_predictor.1} parent=0 // pred_region
    _
  $region61: #{mask_predictor.1} parent=0 // pred_fallthru
    _
  %v53 = vld [vmem:[%s0] sm:$0xff]
  %v54 = vld [vmem:[%s0 + $0x8] sm:$0xff]
  %v55 = vld [vmem:[%s0 + $0x10] sm:$0xff]
  %v56 = vld [vmem:[%s0 + $0x18] sm:$0xff]
  %v57 = vld [vmem:[%s0 + $0x20] sm:$0xff]
  %v58 = vld [vmem:[%s0 + $0x28] sm:$0xff]
  %v59 = vld [vmem:[%s0 + $0x30] sm:$0xff]
  %v60 = vld [vmem:[%s0 + $0x38] sm:$0xff]
  %v61 = vld [vmem:[%s3] sm:$0x3]
  %v62 = vld [vmem:[%s4] sm:$0x3]
  %v63 = vadd.f32 %v53, %v54
  %64 = vadd.xlane.f32.xlu0 %v63
  %v65 = vpop.xlane.xlu0 %64
  %v66 = vadd.f32 %v55, %v56
  %67 = vadd.xlane.f32.xlu0 %v66
  %v68 = vpop.xlane.xlu0 %67
  %v69 = vadd.f32 %v57, %v58
  %70 = vadd.xlane.f32.xlu0 %v69
  %v71 = vpop.xlane.xlu0 %70
  %v72 = vadd.f32 %v59, %v60
  %73 = vadd.xlane.f32.xlu0 %v72
  %v74 = vpop.xlane.xlu0 %73
  %v75 = vrcp.pop 256.0
  %v76 = vmul.f32 %v65, %v75
  %v77 = vmul.f32 %v68, %v75
  %v78 = vmul.f32 %v71, %v75
  %v79 = vmul.f32 %v74, %v75
  %v80 = vsub.f32 %v53, %v76
  %v81 = vsub.f32 %v54, %v76
  %v82 = vsub.f32 %v55, %v77
  %v83 = vsub.f32 %v56, %v77
  %v84 = vsub.f32 %v57, %v78
  %v85 = vsub.f32 %v58, %v78
  %v86 = vsub.f32 %v59, %v79
  %v87 = vsub.f32 %v60, %v79
  %v88 = vmul.f32 %v80, %v80
  %v89 = vmul.f32 %v81, %v81
  %v90 = vmul.f32 %v82, %v82
  %v91 = vmul.f32 %v83, %v83
  %v92 = vmul.f32 %v84, %v84
  %v93 = vmul.f32 %v85, %v85
  %v94 = vmul.f32 %v86, %v86
  %v95 = vmul.f32 %v87, %v87
  %v96 = vadd.f32 %v88, %v89
  %97 = vadd.xlane.f32.xlu0 %v96
  %v98 = vpop.xlane.xlu0 %97
  %v99 = vadd.f32 %v90, %v91
  %100 = vadd.xlane.f32.xlu0 %v99
  %v101 = vpop.xlane.xlu0 %100
  %v102 = vadd.f32 %v92, %v93
  %103 = vadd.xlane.f32.xlu0 %v102
  %v104 = vpop.xlane.xlu0 %103
  %v105 = vadd.f32 %v94, %v95
  %106 = vadd.xlane.f32.xlu0 %v105
  %v107 = vpop.xlane.xlu0 %106
  %v108 = vmul.f32 %v98, %v75
  %v109 = vmul.f32 %v101, %v75
  %v110 = vmul.f32 %v104, %v75
  %v111 = vmul.f32 %v107, %v75
  %v112 = vadd.f32 %v108, 1e-05
  %v113 = vadd.f32 %v109, 1e-05
  %v114 = vadd.f32 %v110, 1e-05
  %v115 = vadd.f32 %v111, 1e-05
  %v116 = vrsqrt.pop %v112
  %v117 = vrsqrt.pop %v113
  %v118 = vrsqrt.pop %v114
  %v119 = vrsqrt.pop %v115
  %v120 = vmul.f32 %v80, %v116
  %v121 = vmul.f32 %v81, %v116
  %v122 = vmul.f32 %v82, %v117
  %v123 = vmul.f32 %v83, %v117
  %v124 = vmul.f32 %v84, %v118
  %v125 = vmul.f32 %v85, %v118
  %v126 = vmul.f32 %v86, %v119
  %v127 = vmul.f32 %v87, %v119
  %v129 = vlaneseq
  %v130 = vshrl.u32 %v129, 7
  %v131 = vsub.s32 0, %v130
  %v132 = vrot.slane %v61, %v131
  %v133 = vlaneseq
  %v134 = vshrl.u32 %v133, 7
  %v135 = vsub.s32 1, %v134
  %v136 = vrot.slane %v61, %v135
  %v139 = vmul.f32 %v120, %v132
  %v140 = vmul.f32 %v121, %v136
  %v141 = vmul.f32 %v122, %v132
  %v142 = vmul.f32 %v123, %v136
  %v143 = vmul.f32 %v124, %v132
  %v144 = vmul.f32 %v125, %v136
  %v145 = vmul.f32 %v126, %v132
  %v146 = vmul.f32 %v127, %v136
  %v148 = vlaneseq
  %v149 = vshrl.u32 %v148, 7
  %v150 = vsub.s32 0, %v149
  %v151 = vrot.slane %v62, %v150
  %v152 = vlaneseq
  %v153 = vshrl.u32 %v152, 7
  %v154 = vsub.s32 1, %v153
  %v155 = vrot.slane %v62, %v154
  %v158 = vadd.f32 %v139, %v151
  %v159 = vadd.f32 %v140, %v155
  %v160 = vadd.f32 %v141, %v151
  %v161 = vadd.f32 %v142, %v155
  %v162 = vadd.f32 %v143, %v151
  %v163 = vadd.f32 %v144, %v155
  %v164 = vadd.f32 %v145, %v151
  %v165 = vadd.f32 %v146, %v155
  %v166 = vpack.c.bf16 %v160, %v158
  %v167 = vpack.c.bf16 %v161, %v159
  %v168 = vpack.c.bf16 %v164, %v162
  %v169 = vpack.c.bf16 %v165, %v163
  %v170 = vld [vmem:[%s5] sm:$0xff]
  %v171 = vld [vmem:[%s5 + $0x8] sm:$0xff]
  %v172 = vld [vmem:[%s5 + $0x10] sm:$0xff]
  %v173 = vld [vmem:[%s5 + $0x18] sm:$0xff]
  %v174 = vld [vmem:[%s5 + $0x20] sm:$0xff]
  %v175 = vld [vmem:[%s5 + $0x28] sm:$0xff]
  %v176 = vld [vmem:[%s5 + $0x30] sm:$0xff]
  %v177 = vld [vmem:[%s5 + $0x38] sm:$0xff]
  %v178 = vld [vmem:[%s5 + $0x40] sm:$0xff]
  %v179 = vld [vmem:[%s5 + $0x48] sm:$0xff]
  %v180 = vld [vmem:[%s5 + $0x50] sm:$0xff]
  %v181 = vld [vmem:[%s5 + $0x58] sm:$0xff]
  %v182 = vld [vmem:[%s5 + $0x60] sm:$0xff]
  %v183 = vld [vmem:[%s5 + $0x68] sm:$0xff]
  %v184 = vld [vmem:[%s5 + $0x70] sm:$0xff]
  %v185 = vld [vmem:[%s5 + $0x78] sm:$0xff]
  %v186 = vld [vmem:[%s5 + $0x80] sm:$0xff]
  %v187 = vld [vmem:[%s5 + $0x88] sm:$0xff]
  %v188 = vld [vmem:[%s5 + $0x90] sm:$0xff]
  %v189 = vld [vmem:[%s5 + $0x98] sm:$0xff]
  %v190 = vld [vmem:[%s5 + $0xa0] sm:$0xff]
  %v191 = vld [vmem:[%s5 + $0xa8] sm:$0xff]
  %v192 = vld [vmem:[%s5 + $0xb0] sm:$0xff]
  %v193 = vld [vmem:[%s5 + $0xb8] sm:$0xff]
  %v194 = vld [vmem:[%s5 + $0xc0] sm:$0xff]
  %v195 = vld [vmem:[%s5 + $0xc8] sm:$0xff]
  %v196 = vld [vmem:[%s5 + $0xd0] sm:$0xff]
  %v197 = vld [vmem:[%s5 + $0xd8] sm:$0xff]
  %v198 = vld [vmem:[%s5 + $0xe0] sm:$0xff]
  %v199 = vld [vmem:[%s5 + $0xe8] sm:$0xff]
  %v200 = vld [vmem:[%s5 + $0xf0] sm:$0xff]
  %v201 = vld [vmem:[%s5 + $0xf8] sm:$0xff]
  %v202 = vld [vmem:[%s6] sm:$0x3]
  %v204 = vlaneseq
  %v205 = vshrl.u32 %v204, 7
  %v206 = vsub.s32 0, %v205
  %v207 = vrot.slane %v202, %v206
  %v208 = vlaneseq
  %v209 = vshrl.u32 %v208, 7
  %v210 = vsub.s32 1, %v209
  %v211 = vrot.slane %v202, %v210
  %v246 = vunpack.c.l.b16 %v170
  %v247 = vunpack.c.h.b16 %v170
  %v248 = vunpack.c.l.b16 %v171
  %v249 = vunpack.c.h.b16 %v171
  %v250 = vunpack.c.l.b16 %v172
  %v251 = vunpack.c.h.b16 %v172
  %v252 = vunpack.c.l.b16 %v173
  %v253 = vunpack.c.h.b16 %v173
  %v254 = vunpack.c.l.b16 %v174
  %v255 = vunpack.c.h.b16 %v174
  %v256 = vunpack.c.l.b16 %v175
  %v257 = vunpack.c.h.b16 %v175
  %v258 = vunpack.c.l.b16 %v176
  %v259 = vunpack.c.h.b16 %v176
  %v260 = vunpack.c.l.b16 %v177
  %v261 = vunpack.c.h.b16 %v177
  %v262 = vunpack.c.l.b16 %v178
  %v263 = vunpack.c.h.b16 %v178
  %v264 = vunpack.c.l.b16 %v179
  %v265 = vunpack.c.h.b16 %v179
  %v266 = vunpack.c.l.b16 %v180
  %v267 = vunpack.c.h.b16 %v180
  %v268 = vunpack.c.l.b16 %v181
  %v269 = vunpack.c.h.b16 %v181
  %v270 = vunpack.c.l.b16 %v182
  %v271 = vunpack.c.h.b16 %v182
  %v272 = vunpack.c.l.b16 %v183
  %v273 = vunpack.c.h.b16 %v183
  %v274 = vunpack.c.l.b16 %v184
  %v275 = vunpack.c.h.b16 %v184
  %v276 = vunpack.c.l.b16 %v185
  %v277 = vunpack.c.h.b16 %v185
  %v278 = vunpack.c.l.b16 %v186
  %v279 = vunpack.c.h.b16 %v186
  %v280 = vunpack.c.l.b16 %v187
  %v281 = vunpack.c.h.b16 %v187
  %v282 = vunpack.c.l.b16 %v188
  %v283 = vunpack.c.h.b16 %v188
  %v284 = vunpack.c.l.b16 %v189
  %v285 = vunpack.c.h.b16 %v189
  %v286 = vunpack.c.l.b16 %v190
  %v287 = vunpack.c.h.b16 %v190
  %v288 = vunpack.c.l.b16 %v191
  %v289 = vunpack.c.h.b16 %v191
  %v290 = vunpack.c.l.b16 %v192
  %v291 = vunpack.c.h.b16 %v192
  %v292 = vunpack.c.l.b16 %v193
  %v293 = vunpack.c.h.b16 %v193
  %v294 = vunpack.c.l.b16 %v194
  %v295 = vunpack.c.h.b16 %v194
  %v296 = vunpack.c.l.b16 %v195
  %v297 = vunpack.c.h.b16 %v195
  %v298 = vunpack.c.l.b16 %v196
  %v299 = vunpack.c.h.b16 %v196
  %v300 = vunpack.c.l.b16 %v197
  %v301 = vunpack.c.h.b16 %v197
  %v302 = vunpack.c.l.b16 %v198
  %v303 = vunpack.c.h.b16 %v198
  %v304 = vunpack.c.l.b16 %v199
  %v305 = vunpack.c.h.b16 %v199
  %v306 = vunpack.c.l.b16 %v200
  %v307 = vunpack.c.h.b16 %v200
  %v308 = vunpack.c.l.b16 %v201
  %v309 = vunpack.c.h.b16 %v201
  %v310 = vpack.c.b16 %v248, %v246
  %v311 = vpack.c.b16 %v249, %v247
  %v312 = vpack.c.b16 %v252, %v250
  %v313 = vpack.c.b16 %v253, %v251
  %v314 = vpack.c.b16 %v256, %v254
  %v315 = vpack.c.b16 %v257, %v255
  %v316 = vpack.c.b16 %v260, %v258
  %v317 = vpack.c.b16 %v261, %v259
  %v318 = vpack.c.b16 %v264, %v262
  %v319 = vpack.c.b16 %v265, %v263
  %v320 = vpack.c.b16 %v268, %v266
  %v321 = vpack.c.b16 %v269, %v267
  %v322 = vpack.c.b16 %v272, %v270
  %v323 = vpack.c.b16 %v273, %v271
  %v324 = vpack.c.b16 %v276, %v274
  %v325 = vpack.c.b16 %v277, %v275
  %v326 = vpack.c.b16 %v280, %v278
  %v327 = vpack.c.b16 %v281, %v279
  %v328 = vpack.c.b16 %v284, %v282
  %v329 = vpack.c.b16 %v285, %v283
  %v330 = vpack.c.b16 %v288, %v286
  %v331 = vpack.c.b16 %v289, %v287
  %v332 = vpack.c.b16 %v292, %v290
  %v333 = vpack.c.b16 %v293, %v291
  %v334 = vpack.c.b16 %v296, %v294
  %v335 = vpack.c.b16 %v297, %v295
  %v336 = vpack.c.b16 %v300, %v298
  %v337 = vpack.c.b16 %v301, %v299
  %v338 = vpack.c.b16 %v304, %v302
  %v339 = vpack.c.b16 %v305, %v303
  %v340 = vpack.c.b16 %v308, %v306
  %v341 = vpack.c.b16 %v309, %v307
  %374 = vmatprep.subr.bf16.mxu0 %v311
  %375 = vmatpush1.bf16.msra.mxu0 %v310
  %376 = vmatprep.subr.bf16.mxu0 %v313
  %377 = vmatpush1.bf16.msra.mxu0 %v312
  %378 = vmatprep.subr.bf16.mxu0 %v315
  %379 = vmatpush1.bf16.msra.mxu0 %v314
  %380 = vmatprep.subr.bf16.mxu0 %v317
  %381 = vmatpush1.bf16.msra.mxu0 %v316
  %382 = vmatprep.subr.bf16.mxu0 %v319
  %383 = vmatpush1.bf16.msra.mxu0 %v318
  %384 = vmatprep.subr.bf16.mxu0 %v321
  %385 = vmatpush1.bf16.msra.mxu0 %v320
  %386 = vmatprep.subr.bf16.mxu0 %v323
  %387 = vmatpush1.bf16.msra.mxu0 %v322
  %388 = vmatprep.subr.bf16.mxu0 %v325
  %389 = vmatpush1.bf16.msra.mxu0 %v324
  %390 = vmatprep.subr.bf16.mxu0 %v327
  %391 = vmatpush1.bf16.msra.mxu0 %v326
  %392 = vmatprep.subr.bf16.mxu0 %v329
  %393 = vmatpush1.bf16.msra.mxu0 %v328
  %394 = vmatprep.subr.bf16.mxu0 %v331
  %395 = vmatpush1.bf16.msra.mxu0 %v330
  %396 = vmatprep.subr.bf16.mxu0 %v333
  %397 = vmatpush1.bf16.msra.mxu0 %v332
  %398 = vmatprep.subr.bf16.mxu0 %v335
  %399 = vmatpush1.bf16.msra.mxu0 %v334
  %400 = vmatprep.subr.bf16.mxu0 %v337
  %401 = vmatpush1.bf16.msra.mxu0 %v336
  %402 = vmatprep.subr.bf16.mxu0 %v339
  %403 = vmatpush1.bf16.msra.mxu0 %v338
  %404 = vmatprep.subr.bf16.mxu0 %v341
  %405 = vmatpush1.bf16.msra.mxu0 %v340
  %406 = vmatprep.mubr.bf16.mxu0 %v167
  %407 = vmatmul.mubr.bf16.gmra.mrb[0].mxu0 %v166
  %v408 = vpop.f32.mrb[0].mxu0
  %v409 = vadd.f32 %v207, %v408
  %v410 = vpop.f32.mrb[0].mxu0
  %v411 = vadd.f32 %v211, %v410
  %v412 = vpop.f32.mrb[0].mxu0
  %v413 = vadd.f32 %v207, %v412
  %v414 = vpop.f32.mrb[0].mxu0
  %v415 = vadd.f32 %v211, %v414
  %416 = vmatprep.mubr.bf16.mxu0 %v169
  %417 = vmatmul.mubr.bf16.gmra.mrb[0].mxu0 %v168
  %v418 = vpop.f32.mrb[0].mxu0
  %v419 = vadd.f32 %v207, %v418
  %v420 = vpop.f32.mrb[0].mxu0
  %v421 = vadd.f32 %v211, %v420
  %v422 = vpop.f32.mrb[0].mxu0
  %v423 = vadd.f32 %v207, %v422
  %v424 = vpop.f32.mrb[0].mxu0
  %v425 = vadd.f32 %v211, %v424
  %426 = vdwg.mxu0
  %v427 = vmul.f32 %v409, %v409
  %v428 = vmul.f32 %v411, %v411
  %v429 = vmul.f32 %v413, %v413
  %v430 = vmul.f32 %v415, %v415
  %v431 = vmul.f32 %v419, %v419
  %v432 = vmul.f32 %v421, %v421
  %v433 = vmul.f32 %v423, %v423
  %v434 = vmul.f32 %v425, %v425
  %v435 = vmul.f32 %v409, %v427
  %v436 = vmul.f32 %v411, %v428
  %v437 = vmul.f32 %v413, %v429
  %v438 = vmul.f32 %v415, %v430
  %v439 = vmul.f32 %v419, %v431
  %v440 = vmul.f32 %v421, %v432
  %v441 = vmul.f32 %v423, %v433
  %v442 = vmul.f32 %v425, %v434
  %v443 = vmul.f32 %v435, 0.044715
  %v444 = vmul.f32 %v436, 0.044715
  %v445 = vmul.f32 %v437, 0.044715
  %v446 = vmul.f32 %v438, 0.044715
  %v447 = vmul.f32 %v439, 0.044715
  %v448 = vmul.f32 %v440, 0.044715
  %v449 = vmul.f32 %v441, 0.044715
  %v450 = vmul.f32 %v442, 0.044715
  %v451 = vadd.f32 %v409, %v443
  %v452 = vadd.f32 %v411, %v444
  %v453 = vadd.f32 %v413, %v445
  %v454 = vadd.f32 %v415, %v446
  %v455 = vadd.f32 %v419, %v447
  %v456 = vadd.f32 %v421, %v448
  %v457 = vadd.f32 %v423, %v449
  %v458 = vadd.f32 %v425, %v450
  %v459 = vmul.f32 %v451, 0.7978846
  %v460 = vmul.f32 %v452, 0.7978846
  %v461 = vmul.f32 %v453, 0.7978846
  %v462 = vmul.f32 %v454, 0.7978846
  %v463 = vmul.f32 %v455, 0.7978846
  %v464 = vmul.f32 %v456, 0.7978846
  %v465 = vmul.f32 %v457, 0.7978846
  %v466 = vmul.f32 %v458, 0.7978846
  %v467 = vtanh.pop %v459
  %v468 = vtanh.pop %v460
  %v469 = vtanh.pop %v461
  %v470 = vtanh.pop %v462
  %v471 = vtanh.pop %v463
  %v472 = vtanh.pop %v464
  %v473 = vtanh.pop %v465
  %v474 = vtanh.pop %v466
  %v475 = vadd.f32 %v467, 1.0
  %v476 = vadd.f32 %v468, 1.0
  %v477 = vadd.f32 %v469, 1.0
  %v478 = vadd.f32 %v470, 1.0
  %v479 = vadd.f32 %v471, 1.0
  %v480 = vadd.f32 %v472, 1.0
  %v481 = vadd.f32 %v473, 1.0
  %v482 = vadd.f32 %v474, 1.0
  %v483 = vmul.f32 %v475, 0.5
  %v484 = vmul.f32 %v476, 0.5
  %v485 = vmul.f32 %v477, 0.5
  %v486 = vmul.f32 %v478, 0.5
  %v487 = vmul.f32 %v479, 0.5
  %v488 = vmul.f32 %v480, 0.5
  %v489 = vmul.f32 %v481, 0.5
  %v490 = vmul.f32 %v482, 0.5
  %v491 = vmul.f32 %v409, %v483
  %v492 = vmul.f32 %v411, %v484
  %v493 = vmul.f32 %v413, %v485
  %v494 = vmul.f32 %v415, %v486
  %v495 = vmul.f32 %v419, %v487
  %v496 = vmul.f32 %v421, %v488
  %v497 = vmul.f32 %v423, %v489
  %v498 = vmul.f32 %v425, %v490
  %v499 = vld [vmem:[%s2] sm:$0xff]
  %v500 = vld [vmem:[%s2 + $0x8] sm:$0xff]
  %v501 = vld [vmem:[%s2 + $0x10] sm:$0xff]
  %v502 = vld [vmem:[%s2 + $0x18] sm:$0xff]
  %vm503 = vcmask 7168
  %v504 = vsel %vm503, %v499, 0.0
  %v505 = vsel %vm503, %v500, 0.0
  %v506 = vadd.f32 %v504, %v505
  %v507 = vrot.slane %v506, 4
  %v508 = vadd.f32 %v506, %v507
  %v509 = vrot.slane %v508, 2
  %v510 = vadd.f32 %v508, %v509
  %v511 = vrot.slane %v510, 1
  %v512 = vadd.f32 %v510, %v511
  %v513 = vsel %vm503, %v501, 0.0
  %v514 = vsel %vm503, %v502, 0.0
  %v515 = vadd.f32 %v513, %v514
  %v516 = vrot.slane %v515, 4
  %v517 = vadd.f32 %v515, %v516
  %v518 = vrot.slane %v517, 2
  %v519 = vadd.f32 %v517, %v518
  %v520 = vrot.slane %v519, 1
  %v521 = vadd.f32 %v519, %v520
  %v522 = vrcp.pop %v512
  %v523 = vrcp.pop %v521
  %525 = vset.pattern.permute.xlu0 0
  %526 = vperm.xlu0 %525, %v499
  %v527 = vpop.permute.xlu0 %526
  %530 = vset.pattern.permute.xlu0 0
  %531 = vperm.xlu0 %530, %v500
  %v532 = vpop.permute.xlu0 %531
  %535 = vset.pattern.permute.xlu0 0
  %536 = vperm.xlu0 %535, %v501
  %v537 = vpop.permute.xlu0 %536
  %540 = vset.pattern.permute.xlu0 0
  %541 = vperm.xlu0 %540, %v502
  %v542 = vpop.permute.xlu0 %541
  %v544 = vmul.f32 %v492, %v527
  %v545 = vmul.f32 %v494, %v532
  %v546 = vmul.f32 %v496, %v537
  %v547 = vmul.f32 %v498, %v542
  %v548 = vadd.f32 %v544, %v545
  %v549 = vrot.slane %v548, 4
  %v550 = vadd.f32 %v548, %v549
  %v551 = vrot.slane %v550, 2
  %v552 = vadd.f32 %v550, %v551
  %v553 = vrot.slane %v552, 1
  %v554 = vadd.f32 %v552, %v553
  %v555 = vadd.f32 %v546, %v547
  %v556 = vrot.slane %v555, 4
  %v557 = vadd.f32 %v555, %v556
  %v558 = vrot.slane %v557, 2
  %v559 = vadd.f32 %v557, %v558
  %v560 = vrot.slane %v559, 1
  %v561 = vadd.f32 %v559, %v560
  %563 = vset.pattern.permute.xlu0 0
  %564 = vperm.xlu0 %563, %v522
  %v565 = vpop.permute.xlu0 %564
  %568 = vset.pattern.permute.xlu0 0
  %569 = vperm.xlu0 %568, %v523
  %v570 = vpop.permute.xlu0 %569
  %v572 = vmul.f32 %v554, %v565
  %v573 = vmul.f32 %v561, %v570
  %v574 = vld [vmem:[%s1] sm:$0x3]
  %v575 = vld [vmem:[%s1 + $0x2] sm:$0x3]
  %v578 = vlaneseq
  %v579 = vshrl.u32 %v578, 7
  %v580 = vsub.s32 0, %v579
  %v581 = vrot.slane %v574, %v580
  %v582 = vlaneseq
  %v583 = vshrl.u32 %v582, 7
  %v584 = vsub.s32 1, %v583
  %v585 = vrot.slane %v574, %v584
  %v586 = vlaneseq
  %v587 = vshrl.u32 %v586, 7
  %v588 = vsub.s32 0, %v587
  %v589 = vrot.slane %v575, %v588
  %v590 = vlaneseq
  %v591 = vshrl.u32 %v590, 7
  %v592 = vsub.s32 1, %v591
  %v593 = vrot.slane %v575, %v592
  %v598 = vmul.f32 %v491, %v581
  %v599 = vmul.f32 %v572, %v585
  %v600 = vmul.f32 %v493, %v581
  %v601 = vmul.f32 %v495, %v589
  %v602 = vmul.f32 %v573, %v593
  %v603 = vmul.f32 %v497, %v589
  %v604 = vld [vmem:[%s7] sm:$0x3]
  %v605 = vld [vmem:[%s8] sm:$0x3]
  %v606 = vadd.f32 %v598, %v599
  %607 = vadd.xlane.f32.xlu0 %v606
  %v608 = vpop.xlane.xlu0 %607
  %v609 = vadd.f32 %v600, %v599
  %610 = vadd.xlane.f32.xlu0 %v609
  %v611 = vpop.xlane.xlu0 %610
  %v612 = vadd.f32 %v601, %v602
  %613 = vadd.xlane.f32.xlu0 %v612
  %v614 = vpop.xlane.xlu0 %613
  %v615 = vadd.f32 %v603, %v602
  %616 = vadd.xlane.f32.xlu0 %v615
  %v617 = vpop.xlane.xlu0 %616
  %v618 = vmul.f32 %v608, %v75
  %v619 = vmul.f32 %v611, %v75
  %v620 = vmul.f32 %v614, %v75
  %v621 = vmul.f32 %v617, %v75
  %v622 = vsub.f32 %v598, %v618
  %v623 = vsub.f32 %v599, %v618
  %v624 = vsub.f32 %v600, %v619
  %v625 = vsub.f32 %v599, %v619
  %v626 = vsub.f32 %v601, %v620
  %v627 = vsub.f32 %v602, %v620
  %v628 = vsub.f32 %v603, %v621
  %v629 = vsub.f32 %v602, %v621
  %v630 = vmul.f32 %v622, %v622
  %v631 = vmul.f32 %v623, %v623
  %v632 = vmul.f32 %v624, %v624
  %v633 = vmul.f32 %v625, %v625
  %v634 = vmul.f32 %v626, %v626
  %v635 = vmul.f32 %v627, %v627
  %v636 = vmul.f32 %v628, %v628
  %v637 = vmul.f32 %v629, %v629
  %v638 = vadd.f32 %v630, %v631
  %639 = vadd.xlane.f32.xlu0 %v638
  %v640 = vpop.xlane.xlu0 %639
  %v641 = vadd.f32 %v632, %v633
  %642 = vadd.xlane.f32.xlu0 %v641
  %v643 = vpop.xlane.xlu0 %642
  %v644 = vadd.f32 %v634, %v635
  %645 = vadd.xlane.f32.xlu0 %v644
  %v646 = vpop.xlane.xlu0 %645
  %v647 = vadd.f32 %v636, %v637
  %648 = vadd.xlane.f32.xlu0 %v647
  %v649 = vpop.xlane.xlu0 %648
  %v650 = vmul.f32 %v640, %v75
  %v651 = vmul.f32 %v643, %v75
  %v652 = vmul.f32 %v646, %v75
  %v653 = vmul.f32 %v649, %v75
  %v654 = vadd.f32 %v650, 1e-05
  %v655 = vadd.f32 %v651, 1e-05
  %v656 = vadd.f32 %v652, 1e-05
  %v657 = vadd.f32 %v653, 1e-05
  %v658 = vrsqrt.pop %v654
  %v659 = vrsqrt.pop %v655
  %v660 = vrsqrt.pop %v656
  %v661 = vrsqrt.pop %v657
  %v662 = vmul.f32 %v622, %v658
  %v663 = vmul.f32 %v623, %v658
  %v664 = vmul.f32 %v624, %v659
  %v665 = vmul.f32 %v625, %v659
  %v666 = vmul.f32 %v626, %v660
  %v667 = vmul.f32 %v627, %v660
  %v668 = vmul.f32 %v628, %v661
  %v669 = vmul.f32 %v629, %v661
  %v671 = vlaneseq
  %v672 = vshrl.u32 %v671, 7
  %v673 = vsub.s32 0, %v672
  %v674 = vrot.slane %v604, %v673
  %v675 = vlaneseq
  %v676 = vshrl.u32 %v675, 7
  %v677 = vsub.s32 1, %v676
  %v678 = vrot.slane %v604, %v677
  %v681 = vmul.f32 %v662, %v674
  %v682 = vmul.f32 %v663, %v678
  %v683 = vmul.f32 %v664, %v674
  %v684 = vmul.f32 %v665, %v678
  %v685 = vmul.f32 %v666, %v674
  %v686 = vmul.f32 %v667, %v678
  %v687 = vmul.f32 %v668, %v674
  %v688 = vmul.f32 %v669, %v678
  %v690 = vlaneseq
  %v691 = vshrl.u32 %v690, 7
  %v692 = vsub.s32 0, %v691
  %v693 = vrot.slane %v605, %v692
  %v694 = vlaneseq
  %v695 = vshrl.u32 %v694, 7
  %v696 = vsub.s32 1, %v695
  %v697 = vrot.slane %v605, %v696
  %v700 = vadd.f32 %v681, %v693
  %v701 = vadd.f32 %v682, %v697
  %v702 = vadd.f32 %v683, %v693
  %v703 = vadd.f32 %v684, %v697
  %v704 = vadd.f32 %v685, %v693
  %v705 = vadd.f32 %v686, %v697
  %v706 = vadd.f32 %v687, %v693
  %v707 = vadd.f32 %v688, %v697
  %v708 = vpack.c.bf16 %v702, %v700
  %v709 = vpack.c.bf16 %v703, %v701
  %v710 = vpack.c.bf16 %v706, %v704
  %v711 = vpack.c.bf16 %v707, %v705
  %v712 = vld [vmem:[%s9] sm:$0xf]
  %v713 = vld [vmem:[%s9 + $0x4] sm:$0xf]
  %v714 = vld [vmem:[%s9 + $0x8] sm:$0xf]
  %v715 = vld [vmem:[%s9 + $0xc] sm:$0xf]
  %v716 = vld [vmem:[%s9 + $0x10] sm:$0xf]
  %v717 = vld [vmem:[%s9 + $0x14] sm:$0xf]
  %v718 = vld [vmem:[%s9 + $0x18] sm:$0xf]
  %v719 = vld [vmem:[%s9 + $0x1c] sm:$0xf]
  %v720 = vld [vmem:[%s9 + $0x20] sm:$0xf]
  %v721 = vld [vmem:[%s9 + $0x24] sm:$0xf]
  %v722 = vld [vmem:[%s9 + $0x28] sm:$0xf]
  %v723 = vld [vmem:[%s9 + $0x2c] sm:$0xf]
  %v724 = vld [vmem:[%s9 + $0x30] sm:$0xf]
  %v725 = vld [vmem:[%s9 + $0x34] sm:$0xf]
  %v726 = vld [vmem:[%s9 + $0x38] sm:$0xf]
  %v727 = vld [vmem:[%s9 + $0x3c] sm:$0xf]
  %v728 = vld [vmem:[%s9 + $0x40] sm:$0xf]
  %v729 = vld [vmem:[%s9 + $0x44] sm:$0xf]
  %v730 = vld [vmem:[%s9 + $0x48] sm:$0xf]
  %v731 = vld [vmem:[%s9 + $0x4c] sm:$0xf]
  %v732 = vld [vmem:[%s9 + $0x50] sm:$0xf]
  %v733 = vld [vmem:[%s9 + $0x54] sm:$0xf]
  %v734 = vld [vmem:[%s9 + $0x58] sm:$0xf]
  %v735 = vld [vmem:[%s9 + $0x5c] sm:$0xf]
  %v736 = vld [vmem:[%s9 + $0x60] sm:$0xf]
  %v737 = vld [vmem:[%s9 + $0x64] sm:$0xf]
  %v738 = vld [vmem:[%s9 + $0x68] sm:$0xf]
  %v739 = vld [vmem:[%s9 + $0x6c] sm:$0xf]
  %v740 = vld [vmem:[%s9 + $0x70] sm:$0xf]
  %v741 = vld [vmem:[%s9 + $0x74] sm:$0xf]
  %v742 = vld [vmem:[%s9 + $0x78] sm:$0xf]
  %v743 = vld [vmem:[%s9 + $0x7c] sm:$0xf]
  %v744 = vld [vmem:[%s10] sm:$0x1]
  %v746 = vlaneseq
  %v747 = vshrl.u32 %v746, 7
  %v748 = vsub.s32 0, %v747
  %v749 = vrot.slane %v744, %v748
  %v783 = vunpack.c.l.b16 %v712
  %v784 = vunpack.c.l.b16 %v713
  %v785 = vunpack.c.l.b16 %v714
  %v786 = vunpack.c.l.b16 %v715
  %v787 = vunpack.c.l.b16 %v716
  %v788 = vunpack.c.l.b16 %v717
  %v789 = vunpack.c.l.b16 %v718
  %v790 = vunpack.c.l.b16 %v719
  %v791 = vunpack.c.l.b16 %v720
  %v792 = vunpack.c.l.b16 %v721
  %v793 = vunpack.c.l.b16 %v722
  %v794 = vunpack.c.l.b16 %v723
  %v795 = vunpack.c.l.b16 %v724
  %v796 = vunpack.c.l.b16 %v725
  %v797 = vunpack.c.l.b16 %v726
  %v798 = vunpack.c.l.b16 %v727
  %v799 = vunpack.c.l.b16 %v728
  %v800 = vunpack.c.l.b16 %v729
  %v801 = vunpack.c.l.b16 %v730
  %v802 = vunpack.c.l.b16 %v731
  %v803 = vunpack.c.l.b16 %v732
  %v804 = vunpack.c.l.b16 %v733
  %v805 = vunpack.c.l.b16 %v734
  %v806 = vunpack.c.l.b16 %v735
  %v807 = vunpack.c.l.b16 %v736
  %v808 = vunpack.c.l.b16 %v737
  %v809 = vunpack.c.l.b16 %v738
  %v810 = vunpack.c.l.b16 %v739
  %v811 = vunpack.c.l.b16 %v740
  %v812 = vunpack.c.l.b16 %v741
  %v813 = vunpack.c.l.b16 %v742
  %v814 = vunpack.c.l.b16 %v743
  %v815 = vpack.c.b16 %v784, %v783
  %v816 = vpack.c.b16 %v786, %v785
  %v817 = vpack.c.b16 %v788, %v787
  %v818 = vpack.c.b16 %v790, %v789
  %v819 = vpack.c.b16 %v792, %v791
  %v820 = vpack.c.b16 %v794, %v793
  %v821 = vpack.c.b16 %v796, %v795
  %v822 = vpack.c.b16 %v798, %v797
  %v823 = vpack.c.b16 %v800, %v799
  %v824 = vpack.c.b16 %v802, %v801
  %v825 = vpack.c.b16 %v804, %v803
  %v826 = vpack.c.b16 %v806, %v805
  %v827 = vpack.c.b16 %v808, %v807
  %v828 = vpack.c.b16 %v810, %v809
  %v829 = vpack.c.b16 %v812, %v811
  %v830 = vpack.c.b16 %v814, %v813
  %847 = vmatprep.subr.bf16.mxu0 0
  %848 = vmatpush1.bf16.msra.mxu0 %v815
  %849 = vmatprep.subr.bf16.mxu0 0
  %850 = vmatpush1.bf16.msra.mxu0 %v816
  %851 = vmatprep.subr.bf16.mxu0 0
  %852 = vmatpush1.bf16.msra.mxu0 %v817
  %853 = vmatprep.subr.bf16.mxu0 0
  %854 = vmatpush1.bf16.msra.mxu0 %v818
  %855 = vmatprep.subr.bf16.mxu0 0
  %856 = vmatpush1.bf16.msra.mxu0 %v819
  %857 = vmatprep.subr.bf16.mxu0 0
  %858 = vmatpush1.bf16.msra.mxu0 %v820
  %859 = vmatprep.subr.bf16.mxu0 0
  %860 = vmatpush1.bf16.msra.mxu0 %v821
  %861 = vmatprep.subr.bf16.mxu0 0
  %862 = vmatpush1.bf16.msra.mxu0 %v822
  %863 = vmatprep.subr.bf16.mxu0 0
  %864 = vmatpush1.bf16.msra.mxu0 %v823
  %865 = vmatprep.subr.bf16.mxu0 0
  %866 = vmatpush1.bf16.msra.mxu0 %v824
  %867 = vmatprep.subr.bf16.mxu0 0
  %868 = vmatpush1.bf16.msra.mxu0 %v825
  %869 = vmatprep.subr.bf16.mxu0 0
  %870 = vmatpush1.bf16.msra.mxu0 %v826
  %871 = vmatprep.subr.bf16.mxu0 0
  %872 = vmatpush1.bf16.msra.mxu0 %v827
  %873 = vmatprep.subr.bf16.mxu0 0
  %874 = vmatpush1.bf16.msra.mxu0 %v828
  %875 = vmatprep.subr.bf16.mxu0 0
  %876 = vmatpush1.bf16.msra.mxu0 %v829
  %877 = vmatprep.subr.bf16.mxu0 0
  %878 = vmatpush1.bf16.msra.mxu0 %v830
  %879 = vmatprep.mubr.bf16.mxu0 %v709
  %880 = vmatmul.mubr.bf16.gmra.mrb[0].mxu0 %v708
  %v881 = vpop.f32.mrb[0].mxu0
  %v882 = vadd.f32 %v749, %v881
  %v883 = vpop.f32.mrb[0].mxu0
  %v884 = vpop.f32.mrb[0].mxu0
  %v885 = vadd.f32 %v749, %v884
  %v886 = vpop.f32.mrb[0].mxu0
  %887 = vmatprep.mubr.bf16.mxu0 %v711
  %888 = vmatmul.mubr.bf16.gmra.mrb[0].mxu0 %v710
  %v889 = vpop.f32.mrb[0].mxu0
  %v890 = vadd.f32 %v749, %v889
  %v891 = vpop.f32.mrb[0].mxu0
  %v892 = vpop.f32.mrb[0].mxu0
  %v893 = vadd.f32 %v749, %v892
  %v894 = vpop.f32.mrb[0].mxu0
  %895 = vdwg.mxu0
  %v896 = vmul.f32 %v882, %v882
  %v897 = vmul.f32 %v885, %v885
  %v898 = vmul.f32 %v890, %v890
  %v899 = vmul.f32 %v893, %v893
  %v900 = vmul.f32 %v882, %v896
  %v901 = vmul.f32 %v885, %v897
  %v902 = vmul.f32 %v890, %v898
  %v903 = vmul.f32 %v893, %v899
  %v904 = vmul.f32 %v900, 0.044715
  %v905 = vmul.f32 %v901, 0.044715
  %v906 = vmul.f32 %v902, 0.044715
  %v907 = vmul.f32 %v903, 0.044715
  %v908 = vadd.f32 %v882, %v904
  %v909 = vadd.f32 %v885, %v905
  %v910 = vadd.f32 %v890, %v906
  %v911 = vadd.f32 %v893, %v907
  %v912 = vmul.f32 %v908, 0.7978846
  %v913 = vmul.f32 %v909, 0.7978846
  %v914 = vmul.f32 %v910, 0.7978846
  %v915 = vmul.f32 %v911, 0.7978846
  %v916 = vtanh.pop %v912
  %v917 = vtanh.pop %v913
  %v918 = vtanh.pop %v914
  %v919 = vtanh.pop %v915
  %v920 = vadd.f32 %v916, 1.0
  %v921 = vadd.f32 %v917, 1.0
  %v922 = vadd.f32 %v918, 1.0
  %v923 = vadd.f32 %v919, 1.0
  %v924 = vmul.f32 %v920, 0.5
  %v925 = vmul.f32 %v921, 0.5
  %v926 = vmul.f32 %v922, 0.5
  %v927 = vmul.f32 %v923, 0.5
  %v928 = vmul.f32 %v882, %v924
  %v929 = vmul.f32 %v885, %v925
  %v930 = vmul.f32 %v890, %v926
  %v931 = vmul.f32 %v893, %v927
  %v932 = vpack.c.bf16 %v929, %v928
  %v933 = vpack.c.bf16 %v931, %v930
  %v934 = vld [vmem:[%s11] sm:$0xf]
  %v935 = vld [vmem:[%s11 + $0x4] sm:$0xf]
  %v936 = vld [vmem:[%s11 + $0x8] sm:$0xf]
  %v937 = vld [vmem:[%s11 + $0xc] sm:$0xf]
  %v938 = vld [vmem:[%s11 + $0x10] sm:$0xf]
  %v939 = vld [vmem:[%s11 + $0x14] sm:$0xf]
  %v940 = vld [vmem:[%s11 + $0x18] sm:$0xf]
  %v941 = vld [vmem:[%s11 + $0x1c] sm:$0xf]
  %v942 = vld [vmem:[%s11 + $0x20] sm:$0xf]
  %v943 = vld [vmem:[%s11 + $0x24] sm:$0xf]
  %v944 = vld [vmem:[%s11 + $0x28] sm:$0xf]
  %v945 = vld [vmem:[%s11 + $0x2c] sm:$0xf]
  %v946 = vld [vmem:[%s11 + $0x30] sm:$0xf]
  %v947 = vld [vmem:[%s11 + $0x34] sm:$0xf]
  %v948 = vld [vmem:[%s11 + $0x38] sm:$0xf]
  %v949 = vld [vmem:[%s11 + $0x3c] sm:$0xf]
  %v950 = vld [vmem:[%s12] sm:$0x1]
  %v952 = vlaneseq
  %v953 = vshrl.u32 %v952, 7
  %v954 = vsub.s32 0, %v953
  %v955 = vrot.slane %v950, %v954
  %v973 = vunpack.c.l.b16 %v934
  %v974 = vunpack.c.l.b16 %v935
  %v975 = vunpack.c.l.b16 %v936
  %v976 = vunpack.c.l.b16 %v937
  %v977 = vunpack.c.l.b16 %v938
  %v978 = vunpack.c.l.b16 %v939
  %v979 = vunpack.c.l.b16 %v940
  %v980 = vunpack.c.l.b16 %v941
  %v981 = vunpack.c.l.b16 %v942
  %v982 = vunpack.c.l.b16 %v943
  %v983 = vunpack.c.l.b16 %v944
  %v984 = vunpack.c.l.b16 %v945
  %v985 = vunpack.c.l.b16 %v946
  %v986 = vunpack.c.l.b16 %v947
  %v987 = vunpack.c.l.b16 %v948
  %v988 = vunpack.c.l.b16 %v949
  %v989 = vpack.c.b16 %v974, %v973
  %v990 = vpack.c.b16 %v976, %v975
  %v991 = vpack.c.b16 %v978, %v977
  %v992 = vpack.c.b16 %v980, %v979
  %v993 = vpack.c.b16 %v982, %v981
  %v994 = vpack.c.b16 %v984, %v983
  %v995 = vpack.c.b16 %v986, %v985
  %v996 = vpack.c.b16 %v988, %v987
  %1005 = vmatprep.subr.bf16.mxu0 0
  %1006 = vmatpush1.bf16.msra.mxu0 %v989
  %1007 = vmatprep.subr.bf16.mxu0 0
  %1008 = vmatpush1.bf16.msra.mxu0 %v990
  %1009 = vmatprep.subr.bf16.mxu0 0
  %1010 = vmatpush1.bf16.msra.mxu0 %v991
  %1011 = vmatprep.subr.bf16.mxu0 0
  %1012 = vmatpush1.bf16.msra.mxu0 %v992
  %1013 = vmatprep.subr.bf16.mxu0 0
  %1014 = vmatpush1.bf16.msra.mxu0 %v993
  %1015 = vmatprep.subr.bf16.mxu0 0
  %1016 = vmatpush1.bf16.msra.mxu0 %v994
  %1017 = vmatprep.subr.bf16.mxu0 0
  %1018 = vmatpush1.bf16.msra.mxu0 %v995
  %1019 = vmatprep.subr.bf16.mxu0 0
  %1020 = vmatpush1.bf16.msra.mxu0 %v996
  %1021 = vmatprep.subr.bf16.mxu0 0
  %1022 = vmatpush1.bf16.msra.mxu0 0
  %1023 = vmatprep.subr.bf16.mxu0 0
  %1024 = vmatpush1.bf16.msra.mxu0 0
  %1025 = vmatprep.subr.bf16.mxu0 0
  %1026 = vmatpush1.bf16.msra.mxu0 0
  %1027 = vmatprep.subr.bf16.mxu0 0
  %1028 = vmatpush1.bf16.msra.mxu0 0
  %1029 = vmatprep.subr.bf16.mxu0 0
  %1030 = vmatpush1.bf16.msra.mxu0 0
  %1031 = vmatprep.subr.bf16.mxu0 0
  %1032 = vmatpush1.bf16.msra.mxu0 0
  %1033 = vmatprep.subr.bf16.mxu0 0
  %1034 = vmatpush1.bf16.msra.mxu0 0
  %1035 = vmatprep.subr.bf16.mxu0 0
  %1036 = vmatpush1.bf16.msra.mxu0 0
  %1037 = vmatprep.mubr.bf16.mxu0 0
  %1038 = vmatmul.mubr.bf16.gmra.mrb[0].mxu0 %v932
  %v1039 = vpop.f32.mrb[0].mxu0
  %v1040 = vadd.f32 %v955, %v1039
  %v1041 = vpop.f32.mrb[0].mxu0
  %v1042 = vpop.f32.mrb[0].mxu0
  %v1043 = vadd.f32 %v955, %v1042
  %v1044 = vpop.f32.mrb[0].mxu0
  %1045 = vmatprep.mubr.bf16.mxu0 0
  %1046 = vmatmul.mubr.bf16.gmra.mrb[0].mxu0 %v933
  %v1047 = vpop.f32.mrb[0].mxu0
  %v1048 = vadd.f32 %v955, %v1047
  %v1049 = vpop.f32.mrb[0].mxu0
  %v1050 = vpop.f32.mrb[0].mxu0
  %v1051 = vadd.f32 %v955, %v1050
  %v1052 = vpop.f32.mrb[0].mxu0
  %1053 = vdwg.mxu0
  %v1054 = vmul.f32 %v1040, %v1040
  %v1055 = vmul.f32 %v1043, %v1043
  %v1056 = vmul.f32 %v1048, %v1048
  %v1057 = vmul.f32 %v1051, %v1051
  %v1058 = vmul.f32 %v1040, %v1054
  %v1059 = vmul.f32 %v1043, %v1055
  %v1060 = vmul.f32 %v1048, %v1056
  %v1061 = vmul.f32 %v1051, %v1057
  %v1062 = vmul.f32 %v1058, 0.044715
  %v1063 = vmul.f32 %v1059, 0.044715
  %v1064 = vmul.f32 %v1060, 0.044715
  %v1065 = vmul.f32 %v1061, 0.044715
  %v1066 = vadd.f32 %v1040, %v1062
  %v1067 = vadd.f32 %v1043, %v1063
  %v1068 = vadd.f32 %v1048, %v1064
  %v1069 = vadd.f32 %v1051, %v1065
  %v1070 = vmul.f32 %v1066, 0.7978846
  %v1071 = vmul.f32 %v1067, 0.7978846
  %v1072 = vmul.f32 %v1068, 0.7978846
  %v1073 = vmul.f32 %v1069, 0.7978846
  %v1074 = vtanh.pop %v1070
  %v1075 = vtanh.pop %v1071
  %v1076 = vtanh.pop %v1072
  %v1077 = vtanh.pop %v1073
  %v1078 = vadd.f32 %v1074, 1.0
  %v1079 = vadd.f32 %v1075, 1.0
  %v1080 = vadd.f32 %v1076, 1.0
  %v1081 = vadd.f32 %v1077, 1.0
  %v1082 = vmul.f32 %v1078, 0.5
  %v1083 = vmul.f32 %v1079, 0.5
  %v1084 = vmul.f32 %v1080, 0.5
  %v1085 = vmul.f32 %v1081, 0.5
  %v1086 = vmul.f32 %v1040, %v1082
  %v1087 = vmul.f32 %v1043, %v1083
  %v1088 = vmul.f32 %v1048, %v1084
  %v1089 = vmul.f32 %v1051, %v1085
  %v1090 = vld [vmem:[%s13] sm:$0x1]
  %v1092 = vlaneseq
  %v1093 = vshrl.u32 %v1092, 7
  %v1094 = vsub.s32 0, %v1093
  %v1095 = vrot.slane %v1090, %v1094
  %v1097 = vmul.f32 %v1086, %v1095
  %v1098 = vmul.f32 %v1087, %v1095
  %v1099 = vmul.f32 %v1088, %v1095
  %v1100 = vmul.f32 %v1089, %v1095
  %vm1101 = vcmask 523264
  %v1102 = vsel %vm1101, %v1097, 0.0
  %1103 = vadd.xlane.f32.xlu0 %v1102
  %v1104 = vpop.xlane.xlu0 %1103
  %v1105 = vsel %vm1101, %v1098, 0.0
  %1106 = vadd.xlane.f32.xlu0 %v1105
  %v1107 = vpop.xlane.xlu0 %1106
  %v1108 = vsel %vm1101, %v1099, 0.0
  %1109 = vadd.xlane.f32.xlu0 %v1108
  %v1110 = vpop.xlane.xlu0 %1109
  %v1111 = vsel %vm1101, %v1100, 0.0
  %1112 = vadd.xlane.f32.xlu0 %v1111
  %v1113 = vpop.xlane.xlu0 %1112
  %v1114 = vld [vmem:[#allocation2] sm:$0x1]
  %v1116 = vlaneseq
  %v1117 = vshrl.u32 %v1116, 7
  %v1118 = vsub.s32 0, %v1117
  %v1119 = vrot.slane %v1114, %v1118
  %v1121 = vadd.f32 %v1104, %v1119
  %v1122 = vadd.f32 %v1107, %v1119
  %v1123 = vadd.f32 %v1110, %v1119
  %v1124 = vadd.f32 %v1113, %v1119
  %v1125 = vxor.u32 %v1121, 2147483648
  %v1126 = vxor.u32 %v1122, 2147483648
  %v1127 = vxor.u32 %v1123, 2147483648
  %v1128 = vxor.u32 %v1124, 2147483648
  %v1129 = vmul.f32 %v1125, 1.442695
  %v1130 = vpow.pop %v1129
  %v1131 = vmul.f32 %v1126, 1.442695
  %v1132 = vpow.pop %v1131
  %v1133 = vmul.f32 %v1127, 1.442695
  %v1134 = vpow.pop %v1133
  %v1135 = vmul.f32 %v1128, 1.442695
  %v1136 = vpow.pop %v1135
  %v1137 = vadd.f32 %v1130, 1.0
  %v1138 = vadd.f32 %v1132, 1.0
  %v1139 = vadd.f32 %v1134, 1.0
  %v1140 = vadd.f32 %v1136, 1.0
  %v1141 = vrcp.pop %v1137
  %v1142 = vmul.f32 1.0, %v1141
  %v1143 = vrcp.pop %v1138
  %v1144 = vmul.f32 1.0, %v1143
  %v1145 = vrcp.pop %v1139
  %v1146 = vmul.f32 1.0, %v1145
  %v1147 = vrcp.pop %v1140
  %v1148 = vmul.f32 1.0, %v1147
  %v1149 = vsub.f32 1.0, %v1142
  %v1150 = vsub.f32 1.0, %v1144
  %v1151 = vsub.f32 1.0, %v1146
  %v1152 = vsub.f32 1.0, %v1148
  %1157 = vrot.lane.b32.xlu0 %v1149, 1
  %v1158 = vpop.permute.xlu0 %1157
  %1159 = vrot.lane.b32.xlu0 %v1150, 1
  %v1160 = vpop.permute.xlu0 %1159
  %1161 = vrot.lane.b32.xlu0 %v1151, 1
  %v1162 = vpop.permute.xlu0 %1161
  %1163 = vrot.lane.b32.xlu0 %v1152, 1
  %v1164 = vpop.permute.xlu0 %1163
  %v1169 = vsel %vm503, %v1142, %v1158
  %v1170 = vsel %vm503, %v1144, %v1160
  %v1171 = vsel %vm503, %v1146, %v1162
  %v1172 = vsel %vm503, %v1148, %v1164
  %vm1173 = vcmask 15360
  %1174 = vst.msk [vmem:[%s15] sm:$0xff] %vm1173, %v1169
  %1175 = vst.msk [vmem:[%s15 + $0x8] sm:$0xff] %vm1173, %v1170
  %1176 = vst.msk [vmem:[%s15 + $0x10] sm:$0xff] %vm1173, %v1171
  %1177 = vst.msk [vmem:[%s15 + $0x18] sm:$0xff] %vm1173, %v1172
  // Predicated region
  $region62: #{mask_predictor.1} parent=0 // pred_check
    _
  $region63: #{mask_predictor.1} parent=0 // pred_check_branch
    %1179 = sbr.rel (0) target = $region65
  $region64: #{mask_predictor.1} parent=0 // pred_region
    _
  $region65: #{mask_predictor.1} parent=0 // pred_fallthru
    _
  // Predicated region
  $region66: #{mask_predictor.1} parent=0 // pred_check
    _
  $region67: #{mask_predictor.1} parent=0 // pred_check_branch
    %1181 = sbr.rel (0) target = $region69
  $region68: #{mask_predictor.1} parent=0 // pred_region
    _
  $region69: #{mask_predictor.1} parent=0 // pred_fallthru
    _

</llo_original>
